<compile_context>
chip_gen: v7x
topology: tpu7x:2x2x1
jax: 0.10.0
libtpu: 0.0.40
codegen_flags: <defaults>
</compile_context>

<pallas_src>
import jax
import jax.numpy as jnp
from jax.experimental import pallas as pl
from jax.experimental.pallas import tpu as pltpu

LANE = 128      # vreg lane width
SUBLANE = 8     # vreg sublane height

# Storage dtype of the 128-padded hidden-layer weight stacks.  bf16 is the
# recommended setting for v5e/v6e/v7x (accumulation stays f32 everywhere).
# Set to jnp.float32 for bit-exact comparison against the reference.
HIDDEN_WEIGHT_DTYPE = jnp.bfloat16


def _round_up(x, m):
    return ((x + m - 1) // m) * m


def _pad2(a, rows, cols):
    r, c = a.shape
    return jnp.pad(a, ((0, rows - r), (0, cols - c)))


# ----------------------------------------------------------------------------
# Kernel body (whole network, one batch tile per grid step, Python-unrolled)
# ----------------------------------------------------------------------------
def _make_kernel(n_fused, n_int):
    def kernel(*refs):
        xp_ref, xc_ref = refs[0], refs[1]
        o_ref = refs[-1]
        it = iter(refs[2:-1])

        # --- first layers (true K, f32 weights), then lane-concat to (TM, 2W)
        wp1_ref, wc1_ref, b1_ref = next(it), next(it), next(it)
        xp = jnp.maximum(
            jnp.dot(xp_ref[...], wp1_ref[...], preferred_element_type=jnp.float32)
            + b1_ref[0:1, :], 0.0)
        xc = jnp.maximum(
            jnp.dot(xc_ref[...], wc1_ref[...], preferred_element_type=jnp.float32)
            + b1_ref[1:2, :], 0.0)
        x = jnp.concatenate([xp, xc], axis=-1)               # (TM, 2W) f32

        # --- fused (block-diagonal) branch hidden layers: (TM,2W)@(2W,2W)
        if n_fused > 0:
            wd_ref, bd_ref = next(it), next(it)
            for l in range(n_fused):
                w = wd_ref[l]                                # (2W, 2W) bf16
                y = jnp.dot(x.astype(w.dtype), w,
                            preferred_element_type=jnp.float32) + bd_ref[l:l + 1, :]
                x = jnp.maximum(y, 0.0)

        # --- interaction layer 1: torch.cat + Linear folded into one (2W,W) dot
        wi_ref, bi_ref = next(it), next(it)
        wi = wi_ref[...]
        xi = jnp.maximum(
            jnp.dot(x.astype(wi.dtype), wi, preferred_element_type=jnp.float32)
            + bi_ref[...], 0.0)                              # (TM, W) f32

        # --- interaction hidden layers
        if n_int > 0:
            wh_ref, bh_ref = next(it), next(it)
            for l in range(n_int):
                w = wh_ref[l]                                # (W, W) bf16
                y = jnp.dot(xi.astype(w.dtype), w,
                            preferred_element_type=jnp.float32) + bh_ref[l:l + 1, :]
                xi = jnp.maximum(y, 0.0)

        # --- final layer (single output): multiply + lane-reduce (VPU+XLU),
        #     avoids an N=1 MXU matmul and yields a (TM, 1) value directly.
        wf_ref, bf_ref = next(it), next(it)                  # (1, W) f32, (1, 1) f32
        y = jnp.sum(xi * wf_ref[...], axis=-1, keepdims=True) + bf_ref[...]
        o_ref[...] = jax.nn.sigmoid(y).astype(o_ref.dtype)

    return kernel


# ----------------------------------------------------------------------------
# One-time parameter packing (padding / stacking / block-diagonal fusion)
# ----------------------------------------------------------------------------
def pack_params(params, hidden_layers_proteins, hidden_layers_compounds,
                hidden_layers_interaction, *, hidden_weight_dtype=HIDDEN_WEIGHT_DTYPE):
    f32 = jnp.float32
    wp1, bp1 = params["dense_proteins1"]
    wc1, bc1 = params["dense_compounds1"]
    KP, KC = wp1.shape[0], wc1.shape[0]

    # single padded feature width for every intermediate activation
    widths = [wp1.shape[1], wc1.shape[1],
              params["dense_interaction_layer1"][0].shape[1]]
    widths += list(hidden_layers_proteins) + list(hidden_layers_compounds)
    widths += list(hidden_layers_interaction)
    W = _round_up(max(widths), LANE)

    ops = []
    # first layers: true K (16 / 8), N padded to W; kept f32 (tiny; avoids bf16
    # sub-16 sublane layouts on the K=8 compounds weight)
    ops.append(_pad2(wp1, KP, W).astype(f32))
    ops.append(_pad2(wc1, KC, W).astype(f32))
    ops.append(jnp.concatenate([_pad2(bp1, 1, W), _pad2(bc1, 1, W)], axis=0).astype(f32))

    # fused branch hidden layers as block-diagonal (2W, 2W) weights; the shorter
    # branch is padded with identity pass-through layers (exact for x >= 0).
    n_prot, n_comp = len(hidden_layers_proteins), len(hidden_layers_compounds)
    n_fused = max(n_prot, n_comp)
    if n_fused:
        eye = jnp.eye(W, dtype=f32)
        zw = jnp.zeros((W, W), f32)
        zb = jnp.zeros((1, W), f32)
        wds, bds = [], []
        for l in range(n_fused):
            if l < n_prot:
                w, b = params[f"fc_proteins{l}"]
                wpl, bpl = _pad2(w, W, W).astype(f32), _pad2(b, 1, W).astype(f32)
            else:
                wpl, bpl = eye, zb
            if l < n_comp:
                w, b = params[f"fc_compounds{l}"]
                wcl, bcl = _pad2(w, W, W).astype(f32), _pad2(b, 1, W).astype(f32)
            else:
                wcl, bcl = eye, zb
            wds.append(jnp.concatenate(
                [jnp.concatenate([wpl, zw], axis=1),
                 jnp.concatenate([zw, wcl], axis=1)], axis=0))
            bds.append(jnp.concatenate([bpl, bcl], axis=1))
        ops.append(jnp.stack(wds).astype(hidden_weight_dtype))   # (n_fused, 2W, 2W)
        ops.append(jnp.concatenate(bds, axis=0).astype(f32))     # (n_fused, 2W)

    # interaction layer 1: row-rearranged (2W, W) weight so that
    # [xp_pad | xc_pad] @ W_full == cat([xp, xc], 1) @ W_int
    prot_final = hidden_layers_proteins[-1] if n_prot else wp1.shape[1]
    wint, bint = params["dense_interaction_layer1"]
    ops.append(jnp.concatenate(
        [_pad2(wint[:prot_final], W, W), _pad2(wint[prot_final:], W, W)],
        axis=0).astype(hidden_weight_dtype))                     # (2W, W)
    ops.append(_pad2(bint, 1, W).astype(f32))

    n_int = len(hidden_layers_interaction)
    if n_int:
        ws = [_pad2(params[f"fc_interaction{l}"][0], W, W) for l in range(n_int)]
        bs = [_pad2(params[f"fc_interaction{l}"][1], 1, W) for l in range(n_int)]
        ops.append(jnp.stack(ws).astype(hidden_weight_dtype))    # (n_int, W, W)
        ops.append(jnp.concatenate(bs, axis=0).astype(f32))      # (n_int, W)

    wf, bf = params["final_layer"]
    ops.append(_pad2(wf.T, 1, W).astype(f32))                    # (1, W)
    ops.append(bf.reshape(1, 1).astype(f32))                     # (1, 1)

    meta = dict(KP=KP, KC=KC, W=W, n_fused=n_fused, n_int=n_int)
    return tuple(ops), meta


# ----------------------------------------------------------------------------
# Per-generation tile / VMEM budget
# ----------------------------------------------------------------------------
def _tile_and_vmem():
    kind = ""
    try:
        kind = jax.devices()[0].device_kind.lower()
    except Exception:
        pass
    if ("v5" in kind) or ("v6" in kind):
        return 2048, 64 << 20      # 128 MiB physical VMEM: big tiles, 64 MiB scoped
    return 1024, 32 << 20          # v7x (64 MiB physical) / unknown: conservative


# ----------------------------------------------------------------------------
# Fused forward wrapper
# ----------------------------------------------------------------------------
def fused_forward(packed, meta, x_proteins, x_compounds, *, tile_m=None):
    M, KP = x_proteins.shape
    _, KC = x_compounds.shape
    assert KP == meta["KP"] and KC == meta["KC"]
    W, n_fused, n_int = meta["W"], meta["n_fused"], meta["n_int"]

    default_tm, vmem_limit = _tile_and_vmem()
    if tile_m is None:
        tile_m = default_tm
    # cap TM at ceil(M/2) (sublane-aligned) so a 2-TC chip gets >= 2 grid steps
    TM = max(SUBLANE, min(tile_m, _round_up(pl.cdiv(M, 2), SUBLANE)))
    grid = (pl.cdiv(M, TM),)   # partial last block handled by Pallas (writes masked)

    in_specs = [pl.BlockSpec((TM, KP), lambda i: (i, 0)),
                pl.BlockSpec((TM, KC), lambda i: (i, 0))]
    for op in packed:   # resident parameters: full-array blocks, constant index map
        in_specs.append(pl.BlockSpec(op.shape, lambda i, _nd=op.ndim: (0,) * _nd))
    out_spec = pl.BlockSpec((TM, 1), lambda i: (i, 0))

    # advisory cost estimate: real HBM traffic + actual in-kernel FLOPs
    flops = 2 * M * (KP * W + KC * W + n_fused * (2 * W) * (2 * W)
                     + (2 * W) * W + n_int * W * W + W)
    bytes_accessed = int(sum(int(op.size) * op.dtype.itemsize for op in packed)
                         + x_proteins.size * x_proteins.dtype.itemsize
                         + x_compounds.size * x_compounds.dtype.itemsize
                         + M * 4)
    cost = pl.CostEstimate(flops=flops, transcendentals=M,
                           bytes_accessed=bytes_accessed)

    return pl.pallas_call(
        _make_kernel(n_fused, n_int),
        out_shape=jax.ShapeDtypeStruct((M, 1), jnp.float32),
        grid_spec=pltpu.PrefetchScalarGridSpec(
            num_scalar_prefetch=0, grid=grid,
            in_specs=in_specs, out_specs=out_spec),
        compiler_params=pltpu.CompilerParams(
            dimension_semantics=("parallel",),
            vmem_limit_bytes=vmem_limit),
        cost_estimate=cost,
    )(x_proteins, x_compounds, *packed)


# ----------------------------------------------------------------------------
# Parameter construction (deterministic, mirrors BaselineModel.__init__)
# ----------------------------------------------------------------------------
def _init_linear(key, in_features, out_features):
    kw, kb = jax.random.split(key)
    bound = 1.0 / jnp.sqrt(jnp.float32(in_features))
    w = jax.random.uniform(kw, (in_features, out_features), jnp.float32, -bound, bound)
    b = jax.random.uniform(kb, (1, out_features), jnp.float32, -bound, bound)
    return w, b


def build_params(key, input_size_proteins, input_size_compounds,
                 hidden_layers_proteins, hidden_layers_compounds,
                 hidden_layers_interaction):
    params = {}
    keys = iter(jax.random.split(key, 64))

    layers_neurons = input_size_proteins * 2
    linear_input = layers_neurons
    params["dense_proteins1"] = _init_linear(next(keys), input_size_proteins, layers_neurons)
    for i, h in enumerate(hidden_layers_proteins):
        params[f"fc_proteins{i}"] = _init_linear(next(keys), linear_input, h)
        linear_input = h
    proteins_final = linear_input

    layers_neurons = input_size_compounds * 2
    params["dense_compounds1"] = _init_linear(next(keys), input_size_compounds, layers_neurons)
    linear_input = layers_neurons
    for i, h in enumerate(hidden_layers_compounds):
        params[f"fc_compounds{i}"] = _init_linear(next(keys), linear_input, h)
        linear_input = h
    compounds_final = linear_input

    params["dense_interaction_layer1"] = _init_linear(
        next(keys), proteins_final + compounds_final, layers_neurons)
    linear_input = layers_neurons
    for i, h in enumerate(hidden_layers_interaction):
        params[f"fc_interaction{i}"] = _init_linear(next(keys), linear_input, h)
        linear_input = h
    params["final_layer"] = _init_linear(next(keys), linear_input, 1)
    return params


# ----------------------------------------------------------------------------
# Pure-JAX reference (no Pallas) for a sanity check
# ----------------------------------------------------------------------------
def _ref_forward(params, x_proteins, x_compounds,
                 hidden_layers_proteins, hidden_layers_compounds,
                 hidden_layers_interaction):
    def lin(x, name, act):
        w, b = params[name]
        y = x @ w + b
        return jnp.maximum(y, 0.0) if act == "relu" else jax.nn.sigmoid(y)

    xp = lin(x_proteins, "dense_proteins1", "relu")
    for i, _ in enumerate(hidden_layers_proteins):
        xp = lin(xp, f"fc_proteins{i}", "relu")
    xc = lin(x_compounds, "dense_compounds1", "relu")
    for i, _ in enumerate(hidden_layers_compounds):
        xc = lin(xc, f"fc_compounds{i}", "relu")
    xi = jnp.concatenate([xp, xc], axis=1)
    xi = lin(xi, "dense_interaction_layer1", "relu")
    for i, _ in enumerate(hidden_layers_interaction):
        xi = lin(xi, f"fc_interaction{i}", "relu")
    return lin(xi, "final_layer", "sigmoid")


# ----------------------------------------------------------------------------
if __name__ == "__main__":
    batch = 2
    input_size_proteins = 16
    input_size_compounds = 8
    hidden_layers_proteins = [32, 16]
    hidden_layers_compounds = [16, 8]
    hidden_layers_interaction = [32, 16]

    key = jax.random.PRNGKey(0)
    k_params, k_xp, k_xc, k_xp2, k_xc2 = jax.random.split(key, 5)

    params = build_params(k_params, input_size_proteins, input_size_compounds,
                          hidden_layers_proteins, hidden_layers_compounds,
                          hidden_layers_interaction)
    packed, meta = pack_params(params, hidden_layers_proteins,
                               hidden_layers_compounds, hidden_layers_interaction)

    # small check (batch=2, single partial tile)
    x_proteins = jax.random.normal(k_xp, (batch, input_size_proteins), jnp.float32)
    x_compounds = jax.random.normal(k_xc, (batch, input_size_compounds), jnp.float32)
    y = jax.block_until_ready(fused_forward(packed, meta, x_proteins, x_compounds))
    y_ref = _ref_forward(params, x_proteins, x_compounds, hidden_layers_proteins,
                         hidden_layers_compounds, hidden_layers_interaction)
    assert y.shape == (batch, 1), y.shape
    # bf16 hidden weights vs f32 reference: loose tolerance (sigmoid outputs in (0,1))
    assert jnp.allclose(y, y_ref, atol=3e-2, rtol=3e-2), (y, y_ref)

    # multi-tile / partial-last-block check (exercises the gridded path)
    batch2 = 200
    xp2 = jax.random.normal(k_xp2, (batch2, input_size_proteins), jnp.float32)
    xc2 = jax.random.normal(k_xc2, (batch2, input_size_compounds), jnp.float32)
    y2 = jax.block_until_ready(fused_forward(packed, meta, xp2, xc2))
    y2_ref = _ref_forward(params, xp2, xc2, hidden_layers_proteins,
                          hidden_layers_compounds, hidden_layers_interaction)
    assert y2.shape == (batch2, 1), y2.shape
    assert jnp.allclose(y2, y2_ref, atol=3e-2, rtol=3e-2)

    print("KERNEL_OK")
</pallas_src>

<mosaic_0001>
module attributes {stable_mosaic.version = 11 : i64} {
  func.func @kernel(%arg0: i32, %arg1: memref<8x16xf32, #tpu.memory_space<vmem>>, %arg2: memref<8x8xf32, #tpu.memory_space<vmem>>, %arg3: memref<16x128xf32, #tpu.memory_space<vmem>>, %arg4: memref<8x128xf32, #tpu.memory_space<vmem>>, %arg5: memref<2x128xf32, #tpu.memory_space<vmem>>, %arg6: memref<2x256x256xbf16, #tpu.memory_space<vmem>>, %arg7: memref<2x256xf32, #tpu.memory_space<vmem>>, %arg8: memref<256x128xbf16, #tpu.memory_space<vmem>>, %arg9: memref<1x128xf32, #tpu.memory_space<vmem>>, %arg10: memref<2x128x128xbf16, #tpu.memory_space<vmem>>, %arg11: memref<2x128xf32, #tpu.memory_space<vmem>>, %arg12: memref<1x128xf32, #tpu.memory_space<vmem>>, %arg13: memref<1x1xf32, #tpu.memory_space<vmem>>, %arg14: memref<8x1xf32, #tpu.memory_space<vmem>>) attributes {dimension_semantics = [#tpu.dimension_semantics<parallel>], iteration_bounds = array<i64: 1>, scalar_prefetch = 0 : i64, scratch_operands = 0 : i64, tpu.core_type = #tpu.core_type<tc>, window_params = [{transform_indices = @transform_0, window_bounds = array<i64: 8, 16>}, {transform_indices = @transform_1, window_bounds = array<i64: 8, 8>}, {pipeline_mode = #tpu.pipeline_mode<synchronous>, transform_indices = @transform_2, window_bounds = array<i64: 16, 128>}, {pipeline_mode = #tpu.pipeline_mode<synchronous>, transform_indices = @transform_3, window_bounds = array<i64: 8, 128>}, {pipeline_mode = #tpu.pipeline_mode<synchronous>, transform_indices = @transform_4, window_bounds = array<i64: 2, 128>}, {pipeline_mode = #tpu.pipeline_mode<synchronous>, transform_indices = @transform_5, window_bounds = array<i64: 2, 256, 256>}, {pipeline_mode = #tpu.pipeline_mode<synchronous>, transform_indices = @transform_6, window_bounds = array<i64: 2, 256>}, {pipeline_mode = #tpu.pipeline_mode<synchronous>, transform_indices = @transform_7, window_bounds = array<i64: 256, 128>}, {pipeline_mode = #tpu.pipeline_mode<synchronous>, transform_indices = @transform_8, window_bounds = array<i64: 1, 128>}, {pipeline_mode = #tpu.pipeline_mode<synchronous>, transform_indices = @transform_9, window_bounds = array<i64: 2, 128, 128>}, {pipeline_mode = #tpu.pipeline_mode<synchronous>, transform_indices = @transform_10, window_bounds = array<i64: 2, 128>}, {pipeline_mode = #tpu.pipeline_mode<synchronous>, transform_indices = @transform_11, window_bounds = array<i64: 1, 128>}, {pipeline_mode = #tpu.pipeline_mode<synchronous>, transform_indices = @transform_12, window_bounds = array<i64: 1, 1>}, {transform_indices = @transform_13, window_bounds = array<i64: 8, 1>}]} {
    %c0 = arith.constant 0 : index
    %c0_0 = arith.constant 0 : index
    %0 = vector.load %arg1[%c0, %c0_0] : memref<8x16xf32, #tpu.memory_space<vmem>>, vector<8x16xf32>
    %c0_1 = arith.constant 0 : index
    %c0_2 = arith.constant 0 : index
    %1 = vector.load %arg3[%c0_1, %c0_2] : memref<16x128xf32, #tpu.memory_space<vmem>>, vector<16x128xf32>
    %cst = arith.constant dense<0.000000e+00> : vector<8x128xf32>
    %2 = tpu.matmul %0, %1, %cst {dimension_numbers = #tpu.dot_dimension_numbers<[1], [0], [0], [1], [0, 0, 1, 1], [], []>} : vector<8x16xf32>, vector<16x128xf32>, vector<8x128xf32> -> vector<8x128xf32>
    %c0_3 = arith.constant 0 : index
    %c0_4 = arith.constant 0 : index
    %3 = vector.load %arg5[%c0_3, %c0_4] : memref<2x128xf32, #tpu.memory_space<vmem>>, vector<1x128xf32>
    %4 = vector.broadcast %3 : vector<1x128xf32> to vector<8x128xf32>
    %5 = arith.addf %2, %4 : vector<8x128xf32>
    %cst_5 = arith.constant 0.000000e+00 : f32
    %6 = vector.broadcast %cst_5 : f32 to vector<8x128xf32>
    %7 = arith.maximumf %5, %6 : vector<8x128xf32>
    %c0_6 = arith.constant 0 : index
    %c0_7 = arith.constant 0 : index
    %8 = vector.load %arg2[%c0_6, %c0_7] : memref<8x8xf32, #tpu.memory_space<vmem>>, vector<8x8xf32>
    %c0_8 = arith.constant 0 : index
    %c0_9 = arith.constant 0 : index
    %9 = vector.load %arg4[%c0_8, %c0_9] : memref<8x128xf32, #tpu.memory_space<vmem>>, vector<8x128xf32>
    %cst_10 = arith.constant dense<0.000000e+00> : vector<8x128xf32>
    %10 = tpu.matmul %8, %9, %cst_10 {dimension_numbers = #tpu.dot_dimension_numbers<[1], [0], [0], [1], [0, 0, 1, 1], [], []>} : vector<8x8xf32>, vector<8x128xf32>, vector<8x128xf32> -> vector<8x128xf32>
    %c1 = arith.constant 1 : index
    %c0_11 = arith.constant 0 : index
    %11 = vector.load %arg5[%c1, %c0_11] : memref<2x128xf32, #tpu.memory_space<vmem>>, vector<1x128xf32>
    %12 = vector.broadcast %11 : vector<1x128xf32> to vector<8x128xf32>
    %13 = arith.addf %10, %12 : vector<8x128xf32>
    %cst_12 = arith.constant 0.000000e+00 : f32
    %14 = vector.broadcast %cst_12 : f32 to vector<8x128xf32>
    %15 = arith.maximumf %13, %14 : vector<8x128xf32>
    %16 = tpu.concatenate %7, %15 in 1 : vector<8x128xf32>, vector<8x128xf32> -> vector<8x256xf32>
    %c0_13 = arith.constant 0 : index
    %c0_14 = arith.constant 0 : index
    %c0_15 = arith.constant 0 : index
    %17 = vector.load %arg6[%c0_13, %c0_14, %c0_15] : memref<2x256x256xbf16, #tpu.memory_space<vmem>>, vector<1x256x256xbf16>
    %18 = vector.shape_cast %17 : vector<1x256x256xbf16> to vector<256x256xbf16>
    %19 = arith.truncf %16 : vector<8x256xf32> to vector<8x256xbf16>
    %cst_16 = arith.constant dense<0.000000e+00> : vector<8x256xf32>
    %20 = tpu.matmul %19, %18, %cst_16 {dimension_numbers = #tpu.dot_dimension_numbers<[1], [0], [0], [1], [0, 0, 1, 1], [], []>} : vector<8x256xbf16>, vector<256x256xbf16>, vector<8x256xf32> -> vector<8x256xf32>
    %c0_17 = arith.constant 0 : index
    %c0_18 = arith.constant 0 : index
    %21 = vector.load %arg7[%c0_17, %c0_18] : memref<2x256xf32, #tpu.memory_space<vmem>>, vector<1x256xf32>
    %22 = vector.broadcast %21 : vector<1x256xf32> to vector<8x256xf32>
    %23 = arith.addf %20, %22 : vector<8x256xf32>
    %cst_19 = arith.constant 0.000000e+00 : f32
    %24 = vector.broadcast %cst_19 : f32 to vector<8x256xf32>
    %25 = arith.maximumf %23, %24 : vector<8x256xf32>
    %c1_20 = arith.constant 1 : index
    %c0_21 = arith.constant 0 : index
    %c0_22 = arith.constant 0 : index
    %26 = vector.load %arg6[%c1_20, %c0_21, %c0_22] : memref<2x256x256xbf16, #tpu.memory_space<vmem>>, vector<1x256x256xbf16>
    %27 = vector.shape_cast %26 : vector<1x256x256xbf16> to vector<256x256xbf16>
    %28 = arith.truncf %25 : vector<8x256xf32> to vector<8x256xbf16>
    %cst_23 = arith.constant dense<0.000000e+00> : vector<8x256xf32>
    %29 = tpu.matmul %28, %27, %cst_23 {dimension_numbers = #tpu.dot_dimension_numbers<[1], [0], [0], [1], [0, 0, 1, 1], [], []>} : vector<8x256xbf16>, vector<256x256xbf16>, vector<8x256xf32> -> vector<8x256xf32>
    %c1_24 = arith.constant 1 : index
    %c0_25 = arith.constant 0 : index
    %30 = vector.load %arg7[%c1_24, %c0_25] : memref<2x256xf32, #tpu.memory_space<vmem>>, vector<1x256xf32>
    %31 = vector.broadcast %30 : vector<1x256xf32> to vector<8x256xf32>
    %32 = arith.addf %29, %31 : vector<8x256xf32>
    %cst_26 = arith.constant 0.000000e+00 : f32
    %33 = vector.broadcast %cst_26 : f32 to vector<8x256xf32>
    %34 = arith.maximumf %32, %33 : vector<8x256xf32>
    %c0_27 = arith.constant 0 : index
    %c0_28 = arith.constant 0 : index
    %35 = vector.load %arg8[%c0_27, %c0_28] : memref<256x128xbf16, #tpu.memory_space<vmem>>, vector<256x128xbf16>
    %36 = arith.truncf %34 : vector<8x256xf32> to vector<8x256xbf16>
    %cst_29 = arith.constant dense<0.000000e+00> : vector<8x128xf32>
    %37 = tpu.matmul %36, %35, %cst_29 {dimension_numbers = #tpu.dot_dimension_numbers<[1], [0], [0], [1], [0, 0, 1, 1], [], []>} : vector<8x256xbf16>, vector<256x128xbf16>, vector<8x128xf32> -> vector<8x128xf32>
    %c0_30 = arith.constant 0 : index
    %c0_31 = arith.constant 0 : index
    %38 = vector.load %arg9[%c0_30, %c0_31] : memref<1x128xf32, #tpu.memory_space<vmem>>, vector<1x128xf32>
    %39 = vector.broadcast %38 : vector<1x128xf32> to vector<8x128xf32>
    %40 = arith.addf %37, %39 : vector<8x128xf32>
    %cst_32 = arith.constant 0.000000e+00 : f32
    %41 = vector.broadcast %cst_32 : f32 to vector<8x128xf32>
    %42 = arith.maximumf %40, %41 : vector<8x128xf32>
    %c0_33 = arith.constant 0 : index
    %c0_34 = arith.constant 0 : index
    %c0_35 = arith.constant 0 : index
    %43 = vector.load %arg10[%c0_33, %c0_34, %c0_35] : memref<2x128x128xbf16, #tpu.memory_space<vmem>>, vector<1x128x128xbf16>
    %44 = vector.shape_cast %43 : vector<1x128x128xbf16> to vector<128x128xbf16>
    %45 = arith.truncf %42 : vector<8x128xf32> to vector<8x128xbf16>
    %cst_36 = arith.constant dense<0.000000e+00> : vector<8x128xf32>
    %46 = tpu.matmul %45, %44, %cst_36 {dimension_numbers = #tpu.dot_dimension_numbers<[1], [0], [0], [1], [0, 0, 1, 1], [], []>} : vector<8x128xbf16>, vector<128x128xbf16>, vector<8x128xf32> -> vector<8x128xf32>
    %c0_37 = arith.constant 0 : index
    %c0_38 = arith.constant 0 : index
    %47 = vector.load %arg11[%c0_37, %c0_38] : memref<2x128xf32, #tpu.memory_space<vmem>>, vector<1x128xf32>
    %48 = vector.broadcast %47 : vector<1x128xf32> to vector<8x128xf32>
    %49 = arith.addf %46, %48 : vector<8x128xf32>
    %cst_39 = arith.constant 0.000000e+00 : f32
    %50 = vector.broadcast %cst_39 : f32 to vector<8x128xf32>
    %51 = arith.maximumf %49, %50 : vector<8x128xf32>
    %c1_40 = arith.constant 1 : index
    %c0_41 = arith.constant 0 : index
    %c0_42 = arith.constant 0 : index
    %52 = vector.load %arg10[%c1_40, %c0_41, %c0_42] : memref<2x128x128xbf16, #tpu.memory_space<vmem>>, vector<1x128x128xbf16>
    %53 = vector.shape_cast %52 : vector<1x128x128xbf16> to vector<128x128xbf16>
    %54 = arith.truncf %51 : vector<8x128xf32> to vector<8x128xbf16>
    %cst_43 = arith.constant dense<0.000000e+00> : vector<8x128xf32>
    %55 = tpu.matmul %54, %53, %cst_43 {dimension_numbers = #tpu.dot_dimension_numbers<[1], [0], [0], [1], [0, 0, 1, 1], [], []>} : vector<8x128xbf16>, vector<128x128xbf16>, vector<8x128xf32> -> vector<8x128xf32>
    %c1_44 = arith.constant 1 : index
    %c0_45 = arith.constant 0 : index
    %56 = vector.load %arg11[%c1_44, %c0_45] : memref<2x128xf32, #tpu.memory_space<vmem>>, vector<1x128xf32>
    %57 = vector.broadcast %56 : vector<1x128xf32> to vector<8x128xf32>
    %58 = arith.addf %55, %57 : vector<8x128xf32>
    %cst_46 = arith.constant 0.000000e+00 : f32
    %59 = vector.broadcast %cst_46 : f32 to vector<8x128xf32>
    %60 = arith.maximumf %58, %59 : vector<8x128xf32>
    %c0_47 = arith.constant 0 : index
    %c0_48 = arith.constant 0 : index
    %61 = vector.load %arg12[%c0_47, %c0_48] : memref<1x128xf32, #tpu.memory_space<vmem>>, vector<1x128xf32>
    %62 = vector.broadcast %61 : vector<1x128xf32> to vector<8x128xf32>
    %63 = arith.mulf %60, %62 : vector<8x128xf32>
    %cst_49 = arith.constant dense<0.000000e+00> : vector<8xf32>
    %64 = vector.multi_reduction <add>, %63, %cst_49 [1] : vector<8x128xf32> to vector<8xf32>
    %65 = vector.shape_cast %64 : vector<8xf32> to vector<8x1xf32>
    %c0_50 = arith.constant 0 : index
    %c0_51 = arith.constant 0 : index
    %66 = vector.load %arg13[%c0_50, %c0_51] : memref<1x1xf32, #tpu.memory_space<vmem>>, vector<1x1xf32>
    %67 = vector.broadcast %66 : vector<1x1xf32> to vector<8x1xf32>
    %68 = arith.addf %65, %67 : vector<8x1xf32>
    %69 = arith.negf %68 : vector<8x1xf32>
    %70 = math.exp %69 : vector<8x1xf32>
    %cst_52 = arith.constant 1.000000e+00 : f32
    %71 = vector.broadcast %cst_52 : f32 to vector<8x1xf32>
    %72 = arith.addf %71, %70 : vector<8x1xf32>
    %73 = arith.divf %71, %72 : vector<8x1xf32>
    %c0_53 = arith.constant 0 : index
    %c0_54 = arith.constant 0 : index
    %74 = vector.load %arg14[%c0_53, %c0_54] : memref<8x1xf32, #tpu.memory_space<vmem>>, vector<8x1xf32>
    tpu.vector_store %arg14[%c0_53, %c0_54], %73 {strides = array<i32>} : memref<8x1xf32, #tpu.memory_space<vmem>>, vector<8x1xf32>,
    return
  }
  func.func @transform_0(%arg0: i32) -> (i32, i32) {
    %c0_i32 = arith.constant 0 : i32
    %c0_i32_0 = arith.constant 0 : i32
    return %arg0, %c0_i32 : i32, i32
  }
  func.func @transform_1(%arg0: i32) -> (i32, i32) {
    %c0_i32 = arith.constant 0 : i32
    %c0_i32_0 = arith.constant 0 : i32
    return %arg0, %c0_i32 : i32, i32
  }
  func.func @transform_2(%arg0: i32) -> (i32, i32) {
    %c0_i32 = arith.constant 0 : i32
    %c0_i32_0 = arith.constant 0 : i32
    %c0_i32_1 = arith.constant 0 : i32
    return %c0_i32, %c0_i32_0 : i32, i32
  }
  func.func @transform_3(%arg0: i32) -> (i32, i32) {
    %c0_i32 = arith.constant 0 : i32
    %c0_i32_0 = arith.constant 0 : i32
    %c0_i32_1 = arith.constant 0 : i32
    return %c0_i32, %c0_i32_0 : i32, i32
  }
  func.func @transform_4(%arg0: i32) -> (i32, i32) {
    %c0_i32 = arith.constant 0 : i32
    %c0_i32_0 = arith.constant 0 : i32
    %c0_i32_1 = arith.constant 0 : i32
    return %c0_i32, %c0_i32_0 : i32, i32
  }
  func.func @transform_5(%arg0: i32) -> (i32, i32, i32) {
    %c0_i32 = arith.constant 0 : i32
    %c0_i32_0 = arith.constant 0 : i32
    %c0_i32_1 = arith.constant 0 : i32
    %c0_i32_2 = arith.constant 0 : i32
    return %c0_i32, %c0_i32_0, %c0_i32_1 : i32, i32, i32
  }
  func.func @transform_6(%arg0: i32) -> (i32, i32) {
    %c0_i32 = arith.constant 0 : i32
    %c0_i32_0 = arith.constant 0 : i32
    %c0_i32_1 = arith.constant 0 : i32
    return %c0_i32, %c0_i32_0 : i32, i32
  }
  func.func @transform_7(%arg0: i32) -> (i32, i32) {
    %c0_i32 = arith.constant 0 : i32
    %c0_i32_0 = arith.constant 0 : i32
    %c0_i32_1 = arith.constant 0 : i32
    return %c0_i32, %c0_i32_0 : i32, i32
  }
  func.func @transform_8(%arg0: i32) -> (i32, i32) {
    %c0_i32 = arith.constant 0 : i32
    %c0_i32_0 = arith.constant 0 : i32
    %c0_i32_1 = arith.constant 0 : i32
    return %c0_i32, %c0_i32_0 : i32, i32
  }
  func.func @transform_9(%arg0: i32) -> (i32, i32, i32) {
    %c0_i32 = arith.constant 0 : i32
    %c0_i32_0 = arith.constant 0 : i32
    %c0_i32_1 = arith.constant 0 : i32
    %c0_i32_2 = arith.constant 0 : i32
    return %c0_i32, %c0_i32_0, %c0_i32_1 : i32, i32, i32
  }
  func.func @transform_10(%arg0: i32) -> (i32, i32) {
    %c0_i32 = arith.constant 0 : i32
    %c0_i32_0 = arith.constant 0 : i32
    %c0_i32_1 = arith.constant 0 : i32
    return %c0_i32, %c0_i32_0 : i32, i32
  }
  func.func @transform_11(%arg0: i32) -> (i32, i32) {
    %c0_i32 = arith.constant 0 : i32
    %c0_i32_0 = arith.constant 0 : i32
    %c0_i32_1 = arith.constant 0 : i32
    return %c0_i32, %c0_i32_0 : i32, i32
  }
  func.func @transform_12(%arg0: i32) -> (i32, i32) {
    %c0_i32 = arith.constant 0 : i32
    %c0_i32_0 = arith.constant 0 : i32
    %c0_i32_1 = arith.constant 0 : i32
    return %c0_i32, %c0_i32_0 : i32, i32
  }
  func.func @transform_13(%arg0: i32) -> (i32, i32) {
    %c0_i32 = arith.constant 0 : i32
    %c0_i32_0 = arith.constant 0 : i32
    return %arg0, %c0_i32 : i32, i32
  }
}

</mosaic_0001>

<llo_original>
// kernel: tpu_custom_call.1
$region0: #{tpu_custom_call.1}
  #allocation0 [shape = 'u32[]', space=smem, size = 0x4, offset = 0x4, fixed_abs, tag = 'smem constant byte address 0x4 - core index']
  #allocation1 [shape = 'u32[144,128]{1,0:T(1,128)}', space=vmem, size = 0x12000, scoped, tag = 'internal scratch']
  #allocation2 [shape = 'f32[1,1]{1,0:T(1,128)S(1)}', space=vmem, size = 0x200, scoped, tag = 'scoped memory for tpu_custom_call.1']
  %s0 = inlined_call_operand.vmem [shape: f32[2,16], index: 0, kind: input, shape index: {}]
  %s1 = inlined_call_operand.hbm [shape: f32[2,8], index: 1, kind: input, shape index: {}]
  %s2 = inlined_call_operand.hbm [shape: f32[16,128], index: 2, kind: input, shape index: {}]
  %s3 = inlined_call_operand.vmem [shape: f32[8,128], index: 3, kind: input, shape index: {}]
  %s4 = inlined_call_operand.vmem [shape: f32[2,128], index: 4, kind: input, shape index: {}]
  %s5 = inlined_call_operand.hbm [shape: bf16[2,256,256], index: 5, kind: input, shape index: {}]
  %s6 = inlined_call_operand.vmem [shape: f32[2,256], index: 6, kind: input, shape index: {}]
  %s7 = inlined_call_operand.hbm [shape: bf16[256,128], index: 7, kind: input, shape index: {}]
  %s8 = inlined_call_operand.vmem [shape: f32[1,128], index: 8, kind: input, shape index: {}]
  %s9 = inlined_call_operand.hbm [shape: bf16[2,128,128], index: 9, kind: input, shape index: {}]
  %s10 = inlined_call_operand.vmem [shape: f32[2,128], index: 10, kind: input, shape index: {}]
  %s11 = inlined_call_operand.vmem [shape: f32[1,128], index: 11, kind: input, shape index: {}]
  %s12 = inlined_call_operand.<no memory space> [shape: f32[1,1], index: 12, kind: input, shape index: {}]
  %s13 = inlined_call_operand.vmem [shape: f32[2,1], index: 13, kind: output, shape index: {}]
  %s14 = sld [smem:[#allocation0]]
  $region112: #{tpu_custom_call.1} parent=0
    _
  %s16 = ssub.s32 1, %s14
  %s17 = scalar_select 0, %s16, %s14
  %v18 = vstv %s12
  %19 = vst [vmem:[#allocation2] sm:$0x1] %v18
  $region1: #{tpu_custom_call.1} parent=0
    #allocation3 [shape = 'u8[4096]{0}', space=vmem, size = 0x1000, scoped, tag = 'input window, operand 1, single buffered']
    #allocation4 [shape = 's32[1]{0}', space=sflag, size = 0x4, scoped, tag = 'scoped memory for tpu_custom_call.1']
    #allocation5 [shape = 'u8[8192]{0}', space=vmem, size = 0x2000, scoped, tag = 'input window, operand 2, single buffered']
    #allocation6 [shape = 's32[1]{0}', space=sflag, size = 0x4, scoped, tag = 'scoped memory for tpu_custom_call.1']
    #allocation7 [shape = 'u8[262144]{0}', space=vmem, size = 0x40000, scoped, tag = 'input window, operand 5, single buffered']
    #allocation8 [shape = 'u8[65536]{0}', space=vmem, size = 0x10000, scoped, tag = 'input window, operand 7, single buffered']
    #allocation9 [shape = 's32[1]{0}', space=sflag, size = 0x4, scoped, tag = 'scoped memory for tpu_custom_call.1']
    #allocation10 [shape = 'u8[65536]{0}', space=vmem, size = 0x10000, scoped, tag = 'input window, operand 9, single buffered']
    #allocation11 [shape = 'u8[4096]{0}', space=vmem, size = 0x1000, scoped, tag = 'output window, operand 0, single buffered']
    %20 = vsyncpa [#allocation4], 0
    %21 = vsyncpa [#allocation6], 0
    %22 = vsyncpa [#allocation9], 0
    // Predicated region
    $region2: #{tpu_custom_call.1} parent=1 // pred_check
      _
    $region3: #{tpu_custom_call.1} parent=1 // pred_check_branch
      %24 = sbr.rel (0) target = $region5
    $region4: #{tpu_custom_call.1} parent=1 // pred_region
      _
    $region5: #{tpu_custom_call.1} parent=1 // pred_fallthru
      _
    // Predicated region
    $region6: #{tpu_custom_call.1} parent=1 // pred_check
      _
    $region7: #{tpu_custom_call.1} parent=1 // pred_check_branch
      %26 = sbr.rel (0) target = $region9
    $region8: #{tpu_custom_call.1} parent=1 // pred_region
      %s28 = ssub.s32 128, 32
      %29 = vsyncadd [#allocation4], %s28
      %s30 = sshll.u32 [#allocation3], 4
      %s31 = int_to_ptr.vmem [resolvable:$true] %s30
      %36 = dma.hbm_to_vmem [thread:$0]  %s1, 32, %s31, [#allocation4], 32, 32, 2
    $region9: #{tpu_custom_call.1} parent=1 // pred_fallthru
      _
    // Predicated region
    $region10: #{tpu_custom_call.1} parent=1 // pred_check
      _
    $region11: #{tpu_custom_call.1} parent=1 // pred_check_branch
      %38 = sbr.rel (0) target = $region13
    $region12: #{tpu_custom_call.1} parent=1 // pred_region
      %s40 = ssub.s32 256, 256
      %41 = vsyncadd [#allocation6], %s40
      %s42 = sshll.u32 [#allocation5], 4
      %s43 = int_to_ptr.vmem [resolvable:$true] %s42
      %48 = dma.hbm_to_vmem [thread:$0]  %s2, 256, %s43, [#allocation6], 128, 128, 8
    $region13: #{tpu_custom_call.1} parent=1 // pred_fallthru
      _
    // Predicated region
    $region14: #{tpu_custom_call.1} parent=1 // pred_check
      _
    $region15: #{tpu_custom_call.1} parent=1 // pred_check_branch
      %50 = sbr.rel (0) target = $region17
    $region16: #{tpu_custom_call.1} parent=1 // pred_region
      _
    $region17: #{tpu_custom_call.1} parent=1 // pred_fallthru
      _
    // Predicated region
    $region18: #{tpu_custom_call.1} parent=1 // pred_check
      _
    $region19: #{tpu_custom_call.1} parent=1 // pred_check_branch
      %52 = sbr.rel (0) target = $region21
    $region20: #{tpu_custom_call.1} parent=1 // pred_region
      _
    $region21: #{tpu_custom_call.1} parent=1 // pred_fallthru
      _
    // Predicated region
    $region22: #{tpu_custom_call.1} parent=1 // pred_check
      _
    $region23: #{tpu_custom_call.1} parent=1 // pred_check_branch
      %54 = sbr.rel (0) target = $region25
    $region24: #{tpu_custom_call.1} parent=1 // pred_region
      %s56 = ssub.s32 8192, 8192
      %57 = vsyncadd [#allocation6], %s56
      %s58 = sshll.u32 [#allocation7], 4
      %s59 = int_to_ptr.vmem [resolvable:$true] %s58
      %64 = dma.hbm_to_vmem [thread:$0]  %s5, 8192, %s59, [#allocation6], 128, 128, 8
    $region25: #{tpu_custom_call.1} parent=1 // pred_fallthru
      _
    // Predicated region
    $region26: #{tpu_custom_call.1} parent=1 // pred_check
      _
    $region27: #{tpu_custom_call.1} parent=1 // pred_check_branch
      %66 = sbr.rel (0) target = $region29
    $region28: #{tpu_custom_call.1} parent=1 // pred_region
      _
    $region29: #{tpu_custom_call.1} parent=1 // pred_fallthru
      _
    // Predicated region
    $region30: #{tpu_custom_call.1} parent=1 // pred_check
      _
    $region31: #{tpu_custom_call.1} parent=1 // pred_check_branch
      %68 = sbr.rel (0) target = $region33
    $region32: #{tpu_custom_call.1} parent=1 // pred_region
      %s70 = ssub.s32 2048, 2048
      %71 = vsyncadd [#allocation9], %s70
      %s72 = sshll.u32 [#allocation8], 4
      %s73 = int_to_ptr.vmem [resolvable:$true] %s72
      %78 = dma.hbm_to_vmem [thread:$0]  %s7, 2048, %s73, [#allocation9], 64, 64, 4
    $region33: #{tpu_custom_call.1} parent=1 // pred_fallthru
      _
    // Predicated region
    $region34: #{tpu_custom_call.1} parent=1 // pred_check
      _
    $region35: #{tpu_custom_call.1} parent=1 // pred_check_branch
      %80 = sbr.rel (0) target = $region37
    $region36: #{tpu_custom_call.1} parent=1 // pred_region
      _
    $region37: #{tpu_custom_call.1} parent=1 // pred_fallthru
      _
    // Predicated region
    $region38: #{tpu_custom_call.1} parent=1 // pred_check
      _
    $region39: #{tpu_custom_call.1} parent=1 // pred_check_branch
      %82 = sbr.rel (0) target = $region41
    $region40: #{tpu_custom_call.1} parent=1 // pred_region
      %s84 = ssub.s32 2048, 2048
      %85 = vsyncadd [#allocation9], %s84
      %s86 = sshll.u32 [#allocation10], 4
      %s87 = int_to_ptr.vmem [resolvable:$true] %s86
      %92 = dma.hbm_to_vmem [thread:$0]  %s9, 2048, %s87, [#allocation9], 64, 64, 4
    $region41: #{tpu_custom_call.1} parent=1 // pred_fallthru
      _
    // Predicated region
    $region42: #{tpu_custom_call.1} parent=1 // pred_check
      _
    $region43: #{tpu_custom_call.1} parent=1 // pred_check_branch
      %94 = sbr.rel (0) target = $region45
    $region44: #{tpu_custom_call.1} parent=1 // pred_region
      _
    $region45: #{tpu_custom_call.1} parent=1 // pred_fallthru
      _
    // Predicated region
    $region46: #{tpu_custom_call.1} parent=1 // pred_check
      _
    $region47: #{tpu_custom_call.1} parent=1 // pred_check_branch
      %96 = sbr.rel (0) target = $region49
    $region48: #{tpu_custom_call.1} parent=1 // pred_region
      _
    $region49: #{tpu_custom_call.1} parent=1 // pred_fallthru
      _
    // Predicated region
    $region50: #{tpu_custom_call.1} parent=1 // pred_check
      _
    $region51: #{tpu_custom_call.1} parent=1 // pred_check_branch
      %98 = sbr.rel (0) target = $region53
    $region52: #{tpu_custom_call.1} parent=1 // pred_region
      _
    $region53: #{tpu_custom_call.1} parent=1 // pred_fallthru
      _
    // Predicated region
    $region54: #{tpu_custom_call.1} parent=1 // pred_check
      _
    $region55: #{tpu_custom_call.1} parent=1 // pred_check_branch
      %100 = sbr.rel (0) target = $region57
    $region56: #{tpu_custom_call.1} parent=1 // pred_region
      %101 = dma.done [#allocation4], 128
    $region57: #{tpu_custom_call.1} parent=1 // pred_fallthru
      _
    // Predicated region
    $region58: #{tpu_custom_call.1} parent=1 // pred_check
      _
    $region59: #{tpu_custom_call.1} parent=1 // pred_check_branch
      %103 = sbr.rel (0) target = $region61
    $region60: #{tpu_custom_call.1} parent=1 // pred_region
      %104 = dma.done [#allocation6], 256
    $region61: #{tpu_custom_call.1} parent=1 // pred_fallthru
      _
    // Predicated region
    $region62: #{tpu_custom_call.1} parent=1 // pred_check
      _
    $region63: #{tpu_custom_call.1} parent=1 // pred_check_branch
      %106 = sbr.rel (0) target = $region65
    $region64: #{tpu_custom_call.1} parent=1 // pred_region
      %107 = dma.done [#allocation6], 8192
    $region65: #{tpu_custom_call.1} parent=1 // pred_fallthru
      _
    // Predicated region
    $region66: #{tpu_custom_call.1} parent=1 // pred_check
      _
    $region67: #{tpu_custom_call.1} parent=1 // pred_check_branch
      %109 = sbr.rel (0) target = $region69
    $region68: #{tpu_custom_call.1} parent=1 // pred_region
      %110 = dma.done [#allocation9], 2048
    $region69: #{tpu_custom_call.1} parent=1 // pred_fallthru
      _
    // Predicated region
    $region70: #{tpu_custom_call.1} parent=1 // pred_check
      _
    $region71: #{tpu_custom_call.1} parent=1 // pred_check_branch
      %112 = sbr.rel (0) target = $region73
    $region72: #{tpu_custom_call.1} parent=1 // pred_region
      %113 = dma.done [#allocation9], 2048
    $region73: #{tpu_custom_call.1} parent=1 // pred_fallthru
      _
    %v115 = vld [vmem:[%s0] sm:$0xff]
    %v116 = vld [vmem:[#allocation5] sm:$0xff]
    %v117 = vld [vmem:[#allocation5 + $0x8] sm:$0xff]
    %v118 = vld [vmem:[%s4] sm:$0x1]
    %v119 = vlaneseq
    %v120 = vshrl.u32 %v119, 7
    %v121 = vsub.s32 0, %v120
    %v122 = vrot.slane %v118, %v121
    %vm123 = vcmask 130048
    %v125 = vsel %vm123, %v115, 0
    %127 = vmatprep.subr.mxu0 0.0
    %128 = vmatpush1.msra.mxu0 %v116
    %129 = vmatprep.subr.mxu0 0.0
    %130 = vmatpush1.msra.mxu0 %v117
    %131 = vmatprep.subr.mxu0 0.0
    %132 = vmatpush1.msra.mxu0 0.0
    %133 = vmatprep.subr.mxu0 0.0
    %134 = vmatpush1.msra.mxu0 0.0
    %135 = vmatprep.subr.mxu0 0.0
    %136 = vmatpush1.msra.mxu0 0.0
    %137 = vmatprep.subr.mxu0 0.0
    %138 = vmatpush1.msra.mxu0 0.0
    %139 = vmatprep.subr.mxu0 0.0
    %140 = vmatpush1.msra.mxu0 0.0
    %141 = vmatprep.subr.mxu0 0.0
    %142 = vmatpush1.msra.mxu0 0.0
    %143 = vmatprep.subr.mxu0 0.0
    %144 = vmatpush1.msra.mxu0 0.0
    %145 = vmatprep.subr.mxu0 0.0
    %146 = vmatpush1.msra.mxu0 0.0
    %147 = vmatprep.subr.mxu0 0.0
    %148 = vmatpush1.msra.mxu0 0.0
    %149 = vmatprep.subr.mxu0 0.0
    %150 = vmatpush1.msra.mxu0 0.0
    %151 = vmatprep.subr.mxu0 0.0
    %152 = vmatpush1.msra.mxu0 0.0
    %153 = vmatprep.subr.mxu0 0.0
    %154 = vmatpush1.msra.mxu0 0.0
    %155 = vmatprep.subr.mxu0 0.0
    %156 = vmatpush1.msra.mxu0 0.0
    %157 = vmatprep.subr.mxu0 0.0
    %158 = vmatpush1.msra.mxu0 0.0
    %159 = vmatprep.subr.mxu0 0.0
    %160 = vmatpush1.msra.mxu0 0.0
    %161 = vmatprep.subr.mxu0 0.0
    %162 = vmatpush1.msra.mxu0 0.0
    %163 = vmatprep.subr.mxu0 0.0
    %164 = vmatpush1.msra.mxu0 0.0
    %165 = vmatprep.subr.mxu0 0.0
    %166 = vmatpush1.msra.mxu0 0.0
    %167 = vmatprep.subr.mxu0 0.0
    %168 = vmatpush1.msra.mxu0 0.0
    %169 = vmatprep.subr.mxu0 0.0
    %170 = vmatpush1.msra.mxu0 0.0
    %171 = vmatprep.subr.mxu0 0.0
    %172 = vmatpush1.msra.mxu0 0.0
    %173 = vmatprep.subr.mxu0 0.0
    %174 = vmatpush1.msra.mxu0 0.0
    %175 = vmatprep.subr.mxu0 0.0
    %176 = vmatpush1.msra.mxu0 0.0
    %177 = vmatprep.subr.mxu0 0.0
    %178 = vmatpush1.msra.mxu0 0.0
    %179 = vmatprep.subr.mxu0 0.0
    %180 = vmatpush1.msra.mxu0 0.0
    %181 = vmatprep.subr.mxu0 0.0
    %182 = vmatpush1.msra.mxu0 0.0
    %183 = vmatprep.subr.mxu0 0.0
    %184 = vmatpush1.msra.mxu0 0.0
    %185 = vmatprep.subr.mxu0 0.0
    %186 = vmatpush1.msra.mxu0 0.0
    %187 = vmatprep.subr.mxu0 0.0
    %188 = vmatpush1.msra.mxu0 0.0
    %189 = vmatprep.subr.mxu0 0.0
    %190 = vmatpush1.msra.mxu0 0.0
    %191 = vmatprep.mubr.f32.mxu0 0.0
    %192 = vmatmul.mubr.f32.gmra.mrb[0].mxu0 %v125
    %v193 = vpop.f32.mrb[0].mxu0
    %v194 = vadd.f32 %v122, %v193
    %v195 = vpop.f32.mrb[0].mxu0
    %196 = vdwg.mxu0
    %v197 = vmax.f32 %v194, 0.0
    %v198 = vld [vmem:[#allocation3] sm:$0xff]
    %v199 = vld [vmem:[%s3] sm:$0xff]
    %v200 = vld [vmem:[%s4 + $0x1] sm:$0x1]
    %v201 = vlaneseq
    %v202 = vshrl.u32 %v201, 7
    %v203 = vsub.s32 0, %v202
    %v204 = vrot.slane %v200, %v203
    %vm205 = vcmask 64512
    %v207 = vsel %vm205, %v198, 0
    %209 = vmatprep.subr.mxu0 0.0
    %210 = vmatpush1.msra.mxu0 %v199
    %211 = vmatprep.subr.mxu0 0.0
    %212 = vmatpush1.msra.mxu0 0.0
    %213 = vmatprep.subr.mxu0 0.0
    %214 = vmatpush1.msra.mxu0 0.0
    %215 = vmatprep.subr.mxu0 0.0
    %216 = vmatpush1.msra.mxu0 0.0
    %217 = vmatprep.subr.mxu0 0.0
    %218 = vmatpush1.msra.mxu0 0.0
    %219 = vmatprep.subr.mxu0 0.0
    %220 = vmatpush1.msra.mxu0 0.0
    %221 = vmatprep.subr.mxu0 0.0
    %222 = vmatpush1.msra.mxu0 0.0
    %223 = vmatprep.subr.mxu0 0.0
    %224 = vmatpush1.msra.mxu0 0.0
    %225 = vmatprep.subr.mxu0 0.0
    %226 = vmatpush1.msra.mxu0 0.0
    %227 = vmatprep.subr.mxu0 0.0
    %228 = vmatpush1.msra.mxu0 0.0
    %229 = vmatprep.subr.mxu0 0.0
    %230 = vmatpush1.msra.mxu0 0.0
    %231 = vmatprep.subr.mxu0 0.0
    %232 = vmatpush1.msra.mxu0 0.0
    %233 = vmatprep.subr.mxu0 0.0
    %234 = vmatpush1.msra.mxu0 0.0
    %235 = vmatprep.subr.mxu0 0.0
    %236 = vmatpush1.msra.mxu0 0.0
    %237 = vmatprep.subr.mxu0 0.0
    %238 = vmatpush1.msra.mxu0 0.0
    %239 = vmatprep.subr.mxu0 0.0
    %240 = vmatpush1.msra.mxu0 0.0
    %241 = vmatprep.subr.mxu0 0.0
    %242 = vmatpush1.msra.mxu0 0.0
    %243 = vmatprep.subr.mxu0 0.0
    %244 = vmatpush1.msra.mxu0 0.0
    %245 = vmatprep.subr.mxu0 0.0
    %246 = vmatpush1.msra.mxu0 0.0
    %247 = vmatprep.subr.mxu0 0.0
    %248 = vmatpush1.msra.mxu0 0.0
    %249 = vmatprep.subr.mxu0 0.0
    %250 = vmatpush1.msra.mxu0 0.0
    %251 = vmatprep.subr.mxu0 0.0
    %252 = vmatpush1.msra.mxu0 0.0
    %253 = vmatprep.subr.mxu0 0.0
    %254 = vmatpush1.msra.mxu0 0.0
    %255 = vmatprep.subr.mxu0 0.0
    %256 = vmatpush1.msra.mxu0 0.0
    %257 = vmatprep.subr.mxu0 0.0
    %258 = vmatpush1.msra.mxu0 0.0
    %259 = vmatprep.subr.mxu0 0.0
    %260 = vmatpush1.msra.mxu0 0.0
    %261 = vmatprep.subr.mxu0 0.0
    %262 = vmatpush1.msra.mxu0 0.0
    %263 = vmatprep.subr.mxu0 0.0
    %264 = vmatpush1.msra.mxu0 0.0
    %265 = vmatprep.subr.mxu0 0.0
    %266 = vmatpush1.msra.mxu0 0.0
    %267 = vmatprep.subr.mxu0 0.0
    %268 = vmatpush1.msra.mxu0 0.0
    %269 = vmatprep.subr.mxu0 0.0
    %270 = vmatpush1.msra.mxu0 0.0
    %271 = vmatprep.subr.mxu0 0.0
    %272 = vmatpush1.msra.mxu0 0.0
    %273 = vmatprep.mubr.f32.mxu0 0.0
    %274 = vmatmul.mubr.f32.gmra.mrb[0].mxu0 %v207
    %v275 = vpop.f32.mrb[0].mxu0
    %v276 = vadd.f32 %v204, %v275
    %v277 = vpop.f32.mrb[0].mxu0
    %278 = vdwg.mxu0
    %v279 = vmax.f32 %v276, 0.0
    %v280 = vld [vmem:[#allocation7] sm:$0xff]
    %v281 = vld [vmem:[#allocation7 + $0x8] sm:$0xff]
    %v282 = vld [vmem:[#allocation7 + $0x10] sm:$0xff]
    %v283 = vld [vmem:[#allocation7 + $0x18] sm:$0xff]
    %v284 = vld [vmem:[#allocation7 + $0x20] sm:$0xff]
    %v285 = vld [vmem:[#allocation7 + $0x28] sm:$0xff]
    %v286 = vld [vmem:[#allocation7 + $0x30] sm:$0xff]
    %v287 = vld [vmem:[#allocation7 + $0x38] sm:$0xff]
    %v288 = vld [vmem:[#allocation7 + $0x40] sm:$0xff]
    %v289 = vld [vmem:[#allocation7 + $0x48] sm:$0xff]
    %v290 = vld [vmem:[#allocation7 + $0x50] sm:$0xff]
    %v291 = vld [vmem:[#allocation7 + $0x58] sm:$0xff]
    %v292 = vld [vmem:[#allocation7 + $0x60] sm:$0xff]
    %v293 = vld [vmem:[#allocation7 + $0x68] sm:$0xff]
    %v294 = vld [vmem:[#allocation7 + $0x70] sm:$0xff]
    %v295 = vld [vmem:[#allocation7 + $0x78] sm:$0xff]
    %v296 = vld [vmem:[#allocation7 + $0x80] sm:$0xff]
    %v297 = vld [vmem:[#allocation7 + $0x88] sm:$0xff]
    %v298 = vld [vmem:[#allocation7 + $0x90] sm:$0xff]
    %v299 = vld [vmem:[#allocation7 + $0x98] sm:$0xff]
    %v300 = vld [vmem:[#allocation7 + $0xa0] sm:$0xff]
    %v301 = vld [vmem:[#allocation7 + $0xa8] sm:$0xff]
    %v302 = vld [vmem:[#allocation7 + $0xb0] sm:$0xff]
    %v303 = vld [vmem:[#allocation7 + $0xb8] sm:$0xff]
    %v304 = vld [vmem:[#allocation7 + $0xc0] sm:$0xff]
    %v305 = vld [vmem:[#allocation7 + $0xc8] sm:$0xff]
    %v306 = vld [vmem:[#allocation7 + $0xd0] sm:$0xff]
    %v307 = vld [vmem:[#allocation7 + $0xd8] sm:$0xff]
    %v308 = vld [vmem:[#allocation7 + $0xe0] sm:$0xff]
    %v309 = vld [vmem:[#allocation7 + $0xe8] sm:$0xff]
    %v310 = vld [vmem:[#allocation7 + $0xf0] sm:$0xff]
    %v311 = vld [vmem:[#allocation7 + $0xf8] sm:$0xff]
    %v312 = vpack.c.bf16 %v197, %v197
    %v313 = vpack.c.bf16 %v279, %v279
    %v314 = vld [vmem:[%s6] ss:$2 sm:$0x3]
    %v316 = vlaneseq
    %v317 = vshrl.u32 %v316, 7
    %v318 = vsub.s32 0, %v317
    %v319 = vrot.slane %v314, %v318
    %v320 = vlaneseq
    %v321 = vshrl.u32 %v320, 7
    %v322 = vsub.s32 1, %v321
    %v323 = vrot.slane %v314, %v322
    %v358 = vunpack.c.l.b16 %v280
    %v359 = vunpack.c.h.b16 %v280
    %v360 = vunpack.c.l.b16 %v281
    %v361 = vunpack.c.h.b16 %v281
    %v362 = vunpack.c.l.b16 %v282
    %v363 = vunpack.c.h.b16 %v282
    %v364 = vunpack.c.l.b16 %v283
    %v365 = vunpack.c.h.b16 %v283
    %v366 = vunpack.c.l.b16 %v284
    %v367 = vunpack.c.h.b16 %v284
    %v368 = vunpack.c.l.b16 %v285
    %v369 = vunpack.c.h.b16 %v285
    %v370 = vunpack.c.l.b16 %v286
    %v371 = vunpack.c.h.b16 %v286
    %v372 = vunpack.c.l.b16 %v287
    %v373 = vunpack.c.h.b16 %v287
    %v374 = vunpack.c.l.b16 %v288
    %v375 = vunpack.c.h.b16 %v288
    %v376 = vunpack.c.l.b16 %v289
    %v377 = vunpack.c.h.b16 %v289
    %v378 = vunpack.c.l.b16 %v290
    %v379 = vunpack.c.h.b16 %v290
    %v380 = vunpack.c.l.b16 %v291
    %v381 = vunpack.c.h.b16 %v291
    %v382 = vunpack.c.l.b16 %v292
    %v383 = vunpack.c.h.b16 %v292
    %v384 = vunpack.c.l.b16 %v293
    %v385 = vunpack.c.h.b16 %v293
    %v386 = vunpack.c.l.b16 %v294
    %v387 = vunpack.c.h.b16 %v294
    %v388 = vunpack.c.l.b16 %v295
    %v389 = vunpack.c.h.b16 %v295
    %v390 = vunpack.c.l.b16 %v296
    %v391 = vunpack.c.h.b16 %v296
    %v392 = vunpack.c.l.b16 %v297
    %v393 = vunpack.c.h.b16 %v297
    %v394 = vunpack.c.l.b16 %v298
    %v395 = vunpack.c.h.b16 %v298
    %v396 = vunpack.c.l.b16 %v299
    %v397 = vunpack.c.h.b16 %v299
    %v398 = vunpack.c.l.b16 %v300
    %v399 = vunpack.c.h.b16 %v300
    %v400 = vunpack.c.l.b16 %v301
    %v401 = vunpack.c.h.b16 %v301
    %v402 = vunpack.c.l.b16 %v302
    %v403 = vunpack.c.h.b16 %v302
    %v404 = vunpack.c.l.b16 %v303
    %v405 = vunpack.c.h.b16 %v303
    %v406 = vunpack.c.l.b16 %v304
    %v407 = vunpack.c.h.b16 %v304
    %v408 = vunpack.c.l.b16 %v305
    %v409 = vunpack.c.h.b16 %v305
    %v410 = vunpack.c.l.b16 %v306
    %v411 = vunpack.c.h.b16 %v306
    %v412 = vunpack.c.l.b16 %v307
    %v413 = vunpack.c.h.b16 %v307
    %v414 = vunpack.c.l.b16 %v308
    %v415 = vunpack.c.h.b16 %v308
    %v416 = vunpack.c.l.b16 %v309
    %v417 = vunpack.c.h.b16 %v309
    %v418 = vunpack.c.l.b16 %v310
    %v419 = vunpack.c.h.b16 %v310
    %v420 = vunpack.c.l.b16 %v311
    %v421 = vunpack.c.h.b16 %v311
    %v422 = vpack.c.b16 %v360, %v358
    %v423 = vpack.c.b16 %v361, %v359
    %v424 = vpack.c.b16 %v364, %v362
    %v425 = vpack.c.b16 %v365, %v363
    %v426 = vpack.c.b16 %v368, %v366
    %v427 = vpack.c.b16 %v369, %v367
    %v428 = vpack.c.b16 %v372, %v370
    %v429 = vpack.c.b16 %v373, %v371
    %v430 = vpack.c.b16 %v376, %v374
    %v431 = vpack.c.b16 %v377, %v375
    %v432 = vpack.c.b16 %v380, %v378
    %v433 = vpack.c.b16 %v381, %v379
    %v434 = vpack.c.b16 %v384, %v382
    %v435 = vpack.c.b16 %v385, %v383
    %v436 = vpack.c.b16 %v388, %v386
    %v437 = vpack.c.b16 %v389, %v387
    %v438 = vpack.c.b16 %v392, %v390
    %v439 = vpack.c.b16 %v393, %v391
    %v440 = vpack.c.b16 %v396, %v394
    %v441 = vpack.c.b16 %v397, %v395
    %v442 = vpack.c.b16 %v400, %v398
    %v443 = vpack.c.b16 %v401, %v399
    %v444 = vpack.c.b16 %v404, %v402
    %v445 = vpack.c.b16 %v405, %v403
    %v446 = vpack.c.b16 %v408, %v406
    %v447 = vpack.c.b16 %v409, %v407
    %v448 = vpack.c.b16 %v412, %v410
    %v449 = vpack.c.b16 %v413, %v411
    %v450 = vpack.c.b16 %v416, %v414
    %v451 = vpack.c.b16 %v417, %v415
    %v452 = vpack.c.b16 %v420, %v418
    %v453 = vpack.c.b16 %v421, %v419
    %486 = vmatprep.subr.bf16.mxu0 %v423
    %487 = vmatpush1.bf16.msra.mxu0 %v422
    %488 = vmatprep.subr.bf16.mxu0 %v425
    %489 = vmatpush1.bf16.msra.mxu0 %v424
    %490 = vmatprep.subr.bf16.mxu0 %v427
    %491 = vmatpush1.bf16.msra.mxu0 %v426
    %492 = vmatprep.subr.bf16.mxu0 %v429
    %493 = vmatpush1.bf16.msra.mxu0 %v428
    %494 = vmatprep.subr.bf16.mxu0 %v431
    %495 = vmatpush1.bf16.msra.mxu0 %v430
    %496 = vmatprep.subr.bf16.mxu0 %v433
    %497 = vmatpush1.bf16.msra.mxu0 %v432
    %498 = vmatprep.subr.bf16.mxu0 %v435
    %499 = vmatpush1.bf16.msra.mxu0 %v434
    %500 = vmatprep.subr.bf16.mxu0 %v437
    %501 = vmatpush1.bf16.msra.mxu0 %v436
    %502 = vmatprep.subr.bf16.mxu0 %v439
    %503 = vmatpush1.bf16.msra.mxu0 %v438
    %504 = vmatprep.subr.bf16.mxu0 %v441
    %505 = vmatpush1.bf16.msra.mxu0 %v440
    %506 = vmatprep.subr.bf16.mxu0 %v443
    %507 = vmatpush1.bf16.msra.mxu0 %v442
    %508 = vmatprep.subr.bf16.mxu0 %v445
    %509 = vmatpush1.bf16.msra.mxu0 %v444
    %510 = vmatprep.subr.bf16.mxu0 %v447
    %511 = vmatpush1.bf16.msra.mxu0 %v446
    %512 = vmatprep.subr.bf16.mxu0 %v449
    %513 = vmatpush1.bf16.msra.mxu0 %v448
    %514 = vmatprep.subr.bf16.mxu0 %v451
    %515 = vmatpush1.bf16.msra.mxu0 %v450
    %516 = vmatprep.subr.bf16.mxu0 %v453
    %517 = vmatpush1.bf16.msra.mxu0 %v452
    %518 = vmatprep.mubr.bf16.mxu0 %v313
    %519 = vmatmul.mubr.bf16.gmra.mrb[0].mxu0 %v312
    %v520 = vpop.f32.mrb[0].mxu0
    %v521 = vadd.f32 %v319, %v520
    %v522 = vpop.f32.mrb[0].mxu0
    %v523 = vadd.f32 %v323, %v522
    %v524 = vpop.f32.mrb[0].mxu0
    %v525 = vpop.f32.mrb[0].mxu0
    %526 = vdwg.mxu0
    %v527 = vmax.f32 %v521, 0.0
    %v528 = vmax.f32 %v523, 0.0
    %s529 = scalar_lea.vmem [#allocation7], 256
    %v530 = vld [vmem:[%s529] sm:$0xff]
    %v531 = vld [vmem:[%s529 + $0x8] sm:$0xff]
    %v532 = vld [vmem:[%s529 + $0x10] sm:$0xff]
    %v533 = vld [vmem:[%s529 + $0x18] sm:$0xff]
    %v534 = vld [vmem:[%s529 + $0x20] sm:$0xff]
    %v535 = vld [vmem:[%s529 + $0x28] sm:$0xff]
    %v536 = vld [vmem:[%s529 + $0x30] sm:$0xff]
    %v537 = vld [vmem:[%s529 + $0x38] sm:$0xff]
    %v538 = vld [vmem:[%s529 + $0x40] sm:$0xff]
    %v539 = vld [vmem:[%s529 + $0x48] sm:$0xff]
    %v540 = vld [vmem:[%s529 + $0x50] sm:$0xff]
    %v541 = vld [vmem:[%s529 + $0x58] sm:$0xff]
    %v542 = vld [vmem:[%s529 + $0x60] sm:$0xff]
    %v543 = vld [vmem:[%s529 + $0x68] sm:$0xff]
    %v544 = vld [vmem:[%s529 + $0x70] sm:$0xff]
    %v545 = vld [vmem:[%s529 + $0x78] sm:$0xff]
    %v546 = vld [vmem:[%s529 + $0x80] sm:$0xff]
    %v547 = vld [vmem:[%s529 + $0x88] sm:$0xff]
    %v548 = vld [vmem:[%s529 + $0x90] sm:$0xff]
    %v549 = vld [vmem:[%s529 + $0x98] sm:$0xff]
    %v550 = vld [vmem:[%s529 + $0xa0] sm:$0xff]
    %v551 = vld [vmem:[%s529 + $0xa8] sm:$0xff]
    %v552 = vld [vmem:[%s529 + $0xb0] sm:$0xff]
    %v553 = vld [vmem:[%s529 + $0xb8] sm:$0xff]
    %v554 = vld [vmem:[%s529 + $0xc0] sm:$0xff]
    %v555 = vld [vmem:[%s529 + $0xc8] sm:$0xff]
    %v556 = vld [vmem:[%s529 + $0xd0] sm:$0xff]
    %v557 = vld [vmem:[%s529 + $0xd8] sm:$0xff]
    %v558 = vld [vmem:[%s529 + $0xe0] sm:$0xff]
    %v559 = vld [vmem:[%s529 + $0xe8] sm:$0xff]
    %v560 = vld [vmem:[%s529 + $0xf0] sm:$0xff]
    %v561 = vld [vmem:[%s529 + $0xf8] sm:$0xff]
    %v562 = vpack.c.bf16 %v527, %v527
    %v563 = vpack.c.bf16 %v528, %v528
    %s564 = scalar_lea.vmem %s6, 1
    %v565 = vld [vmem:[%s564] ss:$2 sm:$0x3]
    %v567 = vlaneseq
    %v568 = vshrl.u32 %v567, 7
    %v569 = vsub.s32 0, %v568
    %v570 = vrot.slane %v565, %v569
    %v571 = vlaneseq
    %v572 = vshrl.u32 %v571, 7
    %v573 = vsub.s32 1, %v572
    %v574 = vrot.slane %v565, %v573
    %v609 = vunpack.c.l.b16 %v530
    %v610 = vunpack.c.h.b16 %v530
    %v611 = vunpack.c.l.b16 %v531
    %v612 = vunpack.c.h.b16 %v531
    %v613 = vunpack.c.l.b16 %v532
    %v614 = vunpack.c.h.b16 %v532
    %v615 = vunpack.c.l.b16 %v533
    %v616 = vunpack.c.h.b16 %v533
    %v617 = vunpack.c.l.b16 %v534
    %v618 = vunpack.c.h.b16 %v534
    %v619 = vunpack.c.l.b16 %v535
    %v620 = vunpack.c.h.b16 %v535
    %v621 = vunpack.c.l.b16 %v536
    %v622 = vunpack.c.h.b16 %v536
    %v623 = vunpack.c.l.b16 %v537
    %v624 = vunpack.c.h.b16 %v537
    %v625 = vunpack.c.l.b16 %v538
    %v626 = vunpack.c.h.b16 %v538
    %v627 = vunpack.c.l.b16 %v539
    %v628 = vunpack.c.h.b16 %v539
    %v629 = vunpack.c.l.b16 %v540
    %v630 = vunpack.c.h.b16 %v540
    %v631 = vunpack.c.l.b16 %v541
    %v632 = vunpack.c.h.b16 %v541
    %v633 = vunpack.c.l.b16 %v542
    %v634 = vunpack.c.h.b16 %v542
    %v635 = vunpack.c.l.b16 %v543
    %v636 = vunpack.c.h.b16 %v543
    %v637 = vunpack.c.l.b16 %v544
    %v638 = vunpack.c.h.b16 %v544
    %v639 = vunpack.c.l.b16 %v545
    %v640 = vunpack.c.h.b16 %v545
    %v641 = vunpack.c.l.b16 %v546
    %v642 = vunpack.c.h.b16 %v546
    %v643 = vunpack.c.l.b16 %v547
    %v644 = vunpack.c.h.b16 %v547
    %v645 = vunpack.c.l.b16 %v548
    %v646 = vunpack.c.h.b16 %v548
    %v647 = vunpack.c.l.b16 %v549
    %v648 = vunpack.c.h.b16 %v549
    %v649 = vunpack.c.l.b16 %v550
    %v650 = vunpack.c.h.b16 %v550
    %v651 = vunpack.c.l.b16 %v551
    %v652 = vunpack.c.h.b16 %v551
    %v653 = vunpack.c.l.b16 %v552
    %v654 = vunpack.c.h.b16 %v552
    %v655 = vunpack.c.l.b16 %v553
    %v656 = vunpack.c.h.b16 %v553
    %v657 = vunpack.c.l.b16 %v554
    %v658 = vunpack.c.h.b16 %v554
    %v659 = vunpack.c.l.b16 %v555
    %v660 = vunpack.c.h.b16 %v555
    %v661 = vunpack.c.l.b16 %v556
    %v662 = vunpack.c.h.b16 %v556
    %v663 = vunpack.c.l.b16 %v557
    %v664 = vunpack.c.h.b16 %v557
    %v665 = vunpack.c.l.b16 %v558
    %v666 = vunpack.c.h.b16 %v558
    %v667 = vunpack.c.l.b16 %v559
    %v668 = vunpack.c.h.b16 %v559
    %v669 = vunpack.c.l.b16 %v560
    %v670 = vunpack.c.h.b16 %v560
    %v671 = vunpack.c.l.b16 %v561
    %v672 = vunpack.c.h.b16 %v561
    %v673 = vpack.c.b16 %v611, %v609
    %v674 = vpack.c.b16 %v612, %v610
    %v675 = vpack.c.b16 %v615, %v613
    %v676 = vpack.c.b16 %v616, %v614
    %v677 = vpack.c.b16 %v619, %v617
    %v678 = vpack.c.b16 %v620, %v618
    %v679 = vpack.c.b16 %v623, %v621
    %v680 = vpack.c.b16 %v624, %v622
    %v681 = vpack.c.b16 %v627, %v625
    %v682 = vpack.c.b16 %v628, %v626
    %v683 = vpack.c.b16 %v631, %v629
    %v684 = vpack.c.b16 %v632, %v630
    %v685 = vpack.c.b16 %v635, %v633
    %v686 = vpack.c.b16 %v636, %v634
    %v687 = vpack.c.b16 %v639, %v637
    %v688 = vpack.c.b16 %v640, %v638
    %v689 = vpack.c.b16 %v643, %v641
    %v690 = vpack.c.b16 %v644, %v642
    %v691 = vpack.c.b16 %v647, %v645
    %v692 = vpack.c.b16 %v648, %v646
    %v693 = vpack.c.b16 %v651, %v649
    %v694 = vpack.c.b16 %v652, %v650
    %v695 = vpack.c.b16 %v655, %v653
    %v696 = vpack.c.b16 %v656, %v654
    %v697 = vpack.c.b16 %v659, %v657
    %v698 = vpack.c.b16 %v660, %v658
    %v699 = vpack.c.b16 %v663, %v661
    %v700 = vpack.c.b16 %v664, %v662
    %v701 = vpack.c.b16 %v667, %v665
    %v702 = vpack.c.b16 %v668, %v666
    %v703 = vpack.c.b16 %v671, %v669
    %v704 = vpack.c.b16 %v672, %v670
    %737 = vmatprep.subr.bf16.mxu0 %v674
    %738 = vmatpush1.bf16.msra.mxu0 %v673
    %739 = vmatprep.subr.bf16.mxu0 %v676
    %740 = vmatpush1.bf16.msra.mxu0 %v675
    %741 = vmatprep.subr.bf16.mxu0 %v678
    %742 = vmatpush1.bf16.msra.mxu0 %v677
    %743 = vmatprep.subr.bf16.mxu0 %v680
    %744 = vmatpush1.bf16.msra.mxu0 %v679
    %745 = vmatprep.subr.bf16.mxu0 %v682
    %746 = vmatpush1.bf16.msra.mxu0 %v681
    %747 = vmatprep.subr.bf16.mxu0 %v684
    %748 = vmatpush1.bf16.msra.mxu0 %v683
    %749 = vmatprep.subr.bf16.mxu0 %v686
    %750 = vmatpush1.bf16.msra.mxu0 %v685
    %751 = vmatprep.subr.bf16.mxu0 %v688
    %752 = vmatpush1.bf16.msra.mxu0 %v687
    %753 = vmatprep.subr.bf16.mxu0 %v690
    %754 = vmatpush1.bf16.msra.mxu0 %v689
    %755 = vmatprep.subr.bf16.mxu0 %v692
    %756 = vmatpush1.bf16.msra.mxu0 %v691
    %757 = vmatprep.subr.bf16.mxu0 %v694
    %758 = vmatpush1.bf16.msra.mxu0 %v693
    %759 = vmatprep.subr.bf16.mxu0 %v696
    %760 = vmatpush1.bf16.msra.mxu0 %v695
    %761 = vmatprep.subr.bf16.mxu0 %v698
    %762 = vmatpush1.bf16.msra.mxu0 %v697
    %763 = vmatprep.subr.bf16.mxu0 %v700
    %764 = vmatpush1.bf16.msra.mxu0 %v699
    %765 = vmatprep.subr.bf16.mxu0 %v702
    %766 = vmatpush1.bf16.msra.mxu0 %v701
    %767 = vmatprep.subr.bf16.mxu0 %v704
    %768 = vmatpush1.bf16.msra.mxu0 %v703
    %769 = vmatprep.mubr.bf16.mxu0 %v563
    %770 = vmatmul.mubr.bf16.gmra.mrb[0].mxu0 %v562
    %v771 = vpop.f32.mrb[0].mxu0
    %v772 = vadd.f32 %v570, %v771
    %v773 = vpop.f32.mrb[0].mxu0
    %v774 = vadd.f32 %v574, %v773
    %v775 = vpop.f32.mrb[0].mxu0
    %v776 = vpop.f32.mrb[0].mxu0
    %777 = vdwg.mxu0
    %v778 = vmax.f32 %v772, 0.0
    %v779 = vmax.f32 %v774, 0.0
    %v780 = vld [vmem:[#allocation8] sm:$0xf]
    %v781 = vld [vmem:[#allocation8 + $0x4] sm:$0xf]
    %v782 = vld [vmem:[#allocation8 + $0x8] sm:$0xf]
    %v783 = vld [vmem:[#allocation8 + $0xc] sm:$0xf]
    %v784 = vld [vmem:[#allocation8 + $0x10] sm:$0xf]
    %v785 = vld [vmem:[#allocation8 + $0x14] sm:$0xf]
    %v786 = vld [vmem:[#allocation8 + $0x18] sm:$0xf]
    %v787 = vld [vmem:[#allocation8 + $0x1c] sm:$0xf]
    %v788 = vld [vmem:[#allocation8 + $0x20] sm:$0xf]
    %v789 = vld [vmem:[#allocation8 + $0x24] sm:$0xf]
    %v790 = vld [vmem:[#allocation8 + $0x28] sm:$0xf]
    %v791 = vld [vmem:[#allocation8 + $0x2c] sm:$0xf]
    %v792 = vld [vmem:[#allocation8 + $0x30] sm:$0xf]
    %v793 = vld [vmem:[#allocation8 + $0x34] sm:$0xf]
    %v794 = vld [vmem:[#allocation8 + $0x38] sm:$0xf]
    %v795 = vld [vmem:[#allocation8 + $0x3c] sm:$0xf]
    %v796 = vld [vmem:[#allocation8 + $0x40] sm:$0xf]
    %v797 = vld [vmem:[#allocation8 + $0x44] sm:$0xf]
    %v798 = vld [vmem:[#allocation8 + $0x48] sm:$0xf]
    %v799 = vld [vmem:[#allocation8 + $0x4c] sm:$0xf]
    %v800 = vld [vmem:[#allocation8 + $0x50] sm:$0xf]
    %v801 = vld [vmem:[#allocation8 + $0x54] sm:$0xf]
    %v802 = vld [vmem:[#allocation8 + $0x58] sm:$0xf]
    %v803 = vld [vmem:[#allocation8 + $0x5c] sm:$0xf]
    %v804 = vld [vmem:[#allocation8 + $0x60] sm:$0xf]
    %v805 = vld [vmem:[#allocation8 + $0x64] sm:$0xf]
    %v806 = vld [vmem:[#allocation8 + $0x68] sm:$0xf]
    %v807 = vld [vmem:[#allocation8 + $0x6c] sm:$0xf]
    %v808 = vld [vmem:[#allocation8 + $0x70] sm:$0xf]
    %v809 = vld [vmem:[#allocation8 + $0x74] sm:$0xf]
    %v810 = vld [vmem:[#allocation8 + $0x78] sm:$0xf]
    %v811 = vld [vmem:[#allocation8 + $0x7c] sm:$0xf]
    %v812 = vpack.c.bf16 %v778, %v778
    %v813 = vpack.c.bf16 %v779, %v779
    %v814 = vld [vmem:[%s8] sm:$0x1]
    %v816 = vlaneseq
    %v817 = vshrl.u32 %v816, 7
    %v818 = vsub.s32 0, %v817
    %v819 = vrot.slane %v814, %v818
    %v853 = vunpack.c.l.b16 %v780
    %v854 = vunpack.c.l.b16 %v781
    %v855 = vunpack.c.l.b16 %v782
    %v856 = vunpack.c.l.b16 %v783
    %v857 = vunpack.c.l.b16 %v784
    %v858 = vunpack.c.l.b16 %v785
    %v859 = vunpack.c.l.b16 %v786
    %v860 = vunpack.c.l.b16 %v787
    %v861 = vunpack.c.l.b16 %v788
    %v862 = vunpack.c.l.b16 %v789
    %v863 = vunpack.c.l.b16 %v790
    %v864 = vunpack.c.l.b16 %v791
    %v865 = vunpack.c.l.b16 %v792
    %v866 = vunpack.c.l.b16 %v793
    %v867 = vunpack.c.l.b16 %v794
    %v868 = vunpack.c.l.b16 %v795
    %v869 = vunpack.c.l.b16 %v796
    %v870 = vunpack.c.l.b16 %v797
    %v871 = vunpack.c.l.b16 %v798
    %v872 = vunpack.c.l.b16 %v799
    %v873 = vunpack.c.l.b16 %v800
    %v874 = vunpack.c.l.b16 %v801
    %v875 = vunpack.c.l.b16 %v802
    %v876 = vunpack.c.l.b16 %v803
    %v877 = vunpack.c.l.b16 %v804
    %v878 = vunpack.c.l.b16 %v805
    %v879 = vunpack.c.l.b16 %v806
    %v880 = vunpack.c.l.b16 %v807
    %v881 = vunpack.c.l.b16 %v808
    %v882 = vunpack.c.l.b16 %v809
    %v883 = vunpack.c.l.b16 %v810
    %v884 = vunpack.c.l.b16 %v811
    %v885 = vpack.c.b16 %v854, %v853
    %v886 = vpack.c.b16 %v856, %v855
    %v887 = vpack.c.b16 %v858, %v857
    %v888 = vpack.c.b16 %v860, %v859
    %v889 = vpack.c.b16 %v862, %v861
    %v890 = vpack.c.b16 %v864, %v863
    %v891 = vpack.c.b16 %v866, %v865
    %v892 = vpack.c.b16 %v868, %v867
    %v893 = vpack.c.b16 %v870, %v869
    %v894 = vpack.c.b16 %v872, %v871
    %v895 = vpack.c.b16 %v874, %v873
    %v896 = vpack.c.b16 %v876, %v875
    %v897 = vpack.c.b16 %v878, %v877
    %v898 = vpack.c.b16 %v880, %v879
    %v899 = vpack.c.b16 %v882, %v881
    %v900 = vpack.c.b16 %v884, %v883
    %917 = vmatprep.subr.bf16.mxu0 0
    %918 = vmatpush1.bf16.msra.mxu0 %v885
    %919 = vmatprep.subr.bf16.mxu0 0
    %920 = vmatpush1.bf16.msra.mxu0 %v886
    %921 = vmatprep.subr.bf16.mxu0 0
    %922 = vmatpush1.bf16.msra.mxu0 %v887
    %923 = vmatprep.subr.bf16.mxu0 0
    %924 = vmatpush1.bf16.msra.mxu0 %v888
    %925 = vmatprep.subr.bf16.mxu0 0
    %926 = vmatpush1.bf16.msra.mxu0 %v889
    %927 = vmatprep.subr.bf16.mxu0 0
    %928 = vmatpush1.bf16.msra.mxu0 %v890
    %929 = vmatprep.subr.bf16.mxu0 0
    %930 = vmatpush1.bf16.msra.mxu0 %v891
    %931 = vmatprep.subr.bf16.mxu0 0
    %932 = vmatpush1.bf16.msra.mxu0 %v892
    %933 = vmatprep.subr.bf16.mxu0 0
    %934 = vmatpush1.bf16.msra.mxu0 %v893
    %935 = vmatprep.subr.bf16.mxu0 0
    %936 = vmatpush1.bf16.msra.mxu0 %v894
    %937 = vmatprep.subr.bf16.mxu0 0
    %938 = vmatpush1.bf16.msra.mxu0 %v895
    %939 = vmatprep.subr.bf16.mxu0 0
    %940 = vmatpush1.bf16.msra.mxu0 %v896
    %941 = vmatprep.subr.bf16.mxu0 0
    %942 = vmatpush1.bf16.msra.mxu0 %v897
    %943 = vmatprep.subr.bf16.mxu0 0
    %944 = vmatpush1.bf16.msra.mxu0 %v898
    %945 = vmatprep.subr.bf16.mxu0 0
    %946 = vmatpush1.bf16.msra.mxu0 %v899
    %947 = vmatprep.subr.bf16.mxu0 0
    %948 = vmatpush1.bf16.msra.mxu0 %v900
    %949 = vmatprep.mubr.bf16.mxu0 %v813
    %950 = vmatmul.mubr.bf16.gmra.mrb[0].mxu0 %v812
    %v951 = vpop.f32.mrb[0].mxu0
    %v952 = vadd.f32 %v819, %v951
    %v953 = vpop.f32.mrb[0].mxu0
    %v954 = vpop.f32.mrb[0].mxu0
    %v955 = vpop.f32.mrb[0].mxu0
    %956 = vdwg.mxu0
    %v957 = vmax.f32 %v952, 0.0
    %v958 = vld [vmem:[#allocation10] sm:$0xf]
    %v959 = vld [vmem:[#allocation10 + $0x4] sm:$0xf]
    %v960 = vld [vmem:[#allocation10 + $0x8] sm:$0xf]
    %v961 = vld [vmem:[#allocation10 + $0xc] sm:$0xf]
    %v962 = vld [vmem:[#allocation10 + $0x10] sm:$0xf]
    %v963 = vld [vmem:[#allocation10 + $0x14] sm:$0xf]
    %v964 = vld [vmem:[#allocation10 + $0x18] sm:$0xf]
    %v965 = vld [vmem:[#allocation10 + $0x1c] sm:$0xf]
    %v966 = vld [vmem:[#allocation10 + $0x20] sm:$0xf]
    %v967 = vld [vmem:[#allocation10 + $0x24] sm:$0xf]
    %v968 = vld [vmem:[#allocation10 + $0x28] sm:$0xf]
    %v969 = vld [vmem:[#allocation10 + $0x2c] sm:$0xf]
    %v970 = vld [vmem:[#allocation10 + $0x30] sm:$0xf]
    %v971 = vld [vmem:[#allocation10 + $0x34] sm:$0xf]
    %v972 = vld [vmem:[#allocation10 + $0x38] sm:$0xf]
    %v973 = vld [vmem:[#allocation10 + $0x3c] sm:$0xf]
    %v974 = vpack.c.bf16 %v957, %v957
    %v975 = vld [vmem:[%s10] sm:$0x1]
    %v976 = vlaneseq
    %v977 = vshrl.u32 %v976, 7
    %v978 = vsub.s32 0, %v977
    %v979 = vrot.slane %v975, %v978
    %v996 = vunpack.c.l.b16 %v958
    %v997 = vunpack.c.l.b16 %v959
    %v998 = vunpack.c.l.b16 %v960
    %v999 = vunpack.c.l.b16 %v961
    %v1000 = vunpack.c.l.b16 %v962
    %v1001 = vunpack.c.l.b16 %v963
    %v1002 = vunpack.c.l.b16 %v964
    %v1003 = vunpack.c.l.b16 %v965
    %v1004 = vunpack.c.l.b16 %v966
    %v1005 = vunpack.c.l.b16 %v967
    %v1006 = vunpack.c.l.b16 %v968
    %v1007 = vunpack.c.l.b16 %v969
    %v1008 = vunpack.c.l.b16 %v970
    %v1009 = vunpack.c.l.b16 %v971
    %v1010 = vunpack.c.l.b16 %v972
    %v1011 = vunpack.c.l.b16 %v973
    %v1012 = vpack.c.b16 %v997, %v996
    %v1013 = vpack.c.b16 %v999, %v998
    %v1014 = vpack.c.b16 %v1001, %v1000
    %v1015 = vpack.c.b16 %v1003, %v1002
    %v1016 = vpack.c.b16 %v1005, %v1004
    %v1017 = vpack.c.b16 %v1007, %v1006
    %v1018 = vpack.c.b16 %v1009, %v1008
    %v1019 = vpack.c.b16 %v1011, %v1010
    %1028 = vmatprep.subr.bf16.mxu0 0
    %1029 = vmatpush1.bf16.msra.mxu0 %v1012
    %1030 = vmatprep.subr.bf16.mxu0 0
    %1031 = vmatpush1.bf16.msra.mxu0 %v1013
    %1032 = vmatprep.subr.bf16.mxu0 0
    %1033 = vmatpush1.bf16.msra.mxu0 %v1014
    %1034 = vmatprep.subr.bf16.mxu0 0
    %1035 = vmatpush1.bf16.msra.mxu0 %v1015
    %1036 = vmatprep.subr.bf16.mxu0 0
    %1037 = vmatpush1.bf16.msra.mxu0 %v1016
    %1038 = vmatprep.subr.bf16.mxu0 0
    %1039 = vmatpush1.bf16.msra.mxu0 %v1017
    %1040 = vmatprep.subr.bf16.mxu0 0
    %1041 = vmatpush1.bf16.msra.mxu0 %v1018
    %1042 = vmatprep.subr.bf16.mxu0 0
    %1043 = vmatpush1.bf16.msra.mxu0 %v1019
    %1044 = vmatprep.subr.bf16.mxu0 0
    %1045 = vmatpush1.bf16.msra.mxu0 0
    %1046 = vmatprep.subr.bf16.mxu0 0
    %1047 = vmatpush1.bf16.msra.mxu0 0
    %1048 = vmatprep.subr.bf16.mxu0 0
    %1049 = vmatpush1.bf16.msra.mxu0 0
    %1050 = vmatprep.subr.bf16.mxu0 0
    %1051 = vmatpush1.bf16.msra.mxu0 0
    %1052 = vmatprep.subr.bf16.mxu0 0
    %1053 = vmatpush1.bf16.msra.mxu0 0
    %1054 = vmatprep.subr.bf16.mxu0 0
    %1055 = vmatpush1.bf16.msra.mxu0 0
    %1056 = vmatprep.subr.bf16.mxu0 0
    %1057 = vmatpush1.bf16.msra.mxu0 0
    %1058 = vmatprep.subr.bf16.mxu0 0
    %1059 = vmatpush1.bf16.msra.mxu0 0
    %1060 = vmatprep.mubr.bf16.mxu0 0
    %1061 = vmatmul.mubr.bf16.gmra.mrb[0].mxu0 %v974
    %v1062 = vpop.f32.mrb[0].mxu0
    %v1063 = vadd.f32 %v979, %v1062
    %v1064 = vpop.f32.mrb[0].mxu0
    %v1065 = vpop.f32.mrb[0].mxu0
    %v1066 = vpop.f32.mrb[0].mxu0
    %1067 = vdwg.mxu0
    %v1068 = vmax.f32 %v1063, 0.0
    %s1069 = scalar_lea.vmem [#allocation10], 64
    %v1070 = vld [vmem:[%s1069] sm:$0xf]
    %v1071 = vld [vmem:[%s1069 + $0x4] sm:$0xf]
    %v1072 = vld [vmem:[%s1069 + $0x8] sm:$0xf]
    %v1073 = vld [vmem:[%s1069 + $0xc] sm:$0xf]
    %v1074 = vld [vmem:[%s1069 + $0x10] sm:$0xf]
    %v1075 = vld [vmem:[%s1069 + $0x14] sm:$0xf]
    %v1076 = vld [vmem:[%s1069 + $0x18] sm:$0xf]
    %v1077 = vld [vmem:[%s1069 + $0x1c] sm:$0xf]
    %v1078 = vld [vmem:[%s1069 + $0x20] sm:$0xf]
    %v1079 = vld [vmem:[%s1069 + $0x24] sm:$0xf]
    %v1080 = vld [vmem:[%s1069 + $0x28] sm:$0xf]
    %v1081 = vld [vmem:[%s1069 + $0x2c] sm:$0xf]
    %v1082 = vld [vmem:[%s1069 + $0x30] sm:$0xf]
    %v1083 = vld [vmem:[%s1069 + $0x34] sm:$0xf]
    %v1084 = vld [vmem:[%s1069 + $0x38] sm:$0xf]
    %v1085 = vld [vmem:[%s1069 + $0x3c] sm:$0xf]
    %v1086 = vpack.c.bf16 %v1068, %v1068
    %v1087 = vld [vmem:[%s10 + $0x1] sm:$0x1]
    %v1088 = vlaneseq
    %v1089 = vshrl.u32 %v1088, 7
    %v1090 = vsub.s32 0, %v1089
    %v1091 = vrot.slane %v1087, %v1090
    %v1108 = vunpack.c.l.b16 %v1070
    %v1109 = vunpack.c.l.b16 %v1071
    %v1110 = vunpack.c.l.b16 %v1072
    %v1111 = vunpack.c.l.b16 %v1073
    %v1112 = vunpack.c.l.b16 %v1074
    %v1113 = vunpack.c.l.b16 %v1075
    %v1114 = vunpack.c.l.b16 %v1076
    %v1115 = vunpack.c.l.b16 %v1077
    %v1116 = vunpack.c.l.b16 %v1078
    %v1117 = vunpack.c.l.b16 %v1079
    %v1118 = vunpack.c.l.b16 %v1080
    %v1119 = vunpack.c.l.b16 %v1081
    %v1120 = vunpack.c.l.b16 %v1082
    %v1121 = vunpack.c.l.b16 %v1083
    %v1122 = vunpack.c.l.b16 %v1084
    %v1123 = vunpack.c.l.b16 %v1085
    %v1124 = vpack.c.b16 %v1109, %v1108
    %v1125 = vpack.c.b16 %v1111, %v1110
    %v1126 = vpack.c.b16 %v1113, %v1112
    %v1127 = vpack.c.b16 %v1115, %v1114
    %v1128 = vpack.c.b16 %v1117, %v1116
    %v1129 = vpack.c.b16 %v1119, %v1118
    %v1130 = vpack.c.b16 %v1121, %v1120
    %v1131 = vpack.c.b16 %v1123, %v1122
    %1140 = vmatprep.subr.bf16.mxu0 0
    %1141 = vmatpush1.bf16.msra.mxu0 %v1124
    %1142 = vmatprep.subr.bf16.mxu0 0
    %1143 = vmatpush1.bf16.msra.mxu0 %v1125
    %1144 = vmatprep.subr.bf16.mxu0 0
    %1145 = vmatpush1.bf16.msra.mxu0 %v1126
    %1146 = vmatprep.subr.bf16.mxu0 0
    %1147 = vmatpush1.bf16.msra.mxu0 %v1127
    %1148 = vmatprep.subr.bf16.mxu0 0
    %1149 = vmatpush1.bf16.msra.mxu0 %v1128
    %1150 = vmatprep.subr.bf16.mxu0 0
    %1151 = vmatpush1.bf16.msra.mxu0 %v1129
    %1152 = vmatprep.subr.bf16.mxu0 0
    %1153 = vmatpush1.bf16.msra.mxu0 %v1130
    %1154 = vmatprep.subr.bf16.mxu0 0
    %1155 = vmatpush1.bf16.msra.mxu0 %v1131
    %1156 = vmatprep.subr.bf16.mxu0 0
    %1157 = vmatpush1.bf16.msra.mxu0 0
    %1158 = vmatprep.subr.bf16.mxu0 0
    %1159 = vmatpush1.bf16.msra.mxu0 0
    %1160 = vmatprep.subr.bf16.mxu0 0
    %1161 = vmatpush1.bf16.msra.mxu0 0
    %1162 = vmatprep.subr.bf16.mxu0 0
    %1163 = vmatpush1.bf16.msra.mxu0 0
    %1164 = vmatprep.subr.bf16.mxu0 0
    %1165 = vmatpush1.bf16.msra.mxu0 0
    %1166 = vmatprep.subr.bf16.mxu0 0
    %1167 = vmatpush1.bf16.msra.mxu0 0
    %1168 = vmatprep.subr.bf16.mxu0 0
    %1169 = vmatpush1.bf16.msra.mxu0 0
    %1170 = vmatprep.subr.bf16.mxu0 0
    %1171 = vmatpush1.bf16.msra.mxu0 0
    %1172 = vmatprep.mubr.bf16.mxu0 0
    %1173 = vmatmul.mubr.bf16.gmra.mrb[0].mxu0 %v1086
    %v1174 = vpop.f32.mrb[0].mxu0
    %v1175 = vadd.f32 %v1091, %v1174
    %v1176 = vpop.f32.mrb[0].mxu0
    %v1177 = vpop.f32.mrb[0].mxu0
    %v1178 = vpop.f32.mrb[0].mxu0
    %1179 = vdwg.mxu0
    %v1180 = vmax.f32 %v1175, 0.0
    %v1181 = vld [vmem:[%s11] sm:$0x1]
    %v1183 = vlaneseq
    %v1184 = vshrl.u32 %v1183, 7
    %v1185 = vsub.s32 0, %v1184
    %v1186 = vrot.slane %v1181, %v1185
    %v1188 = vmul.f32 %v1180, %v1186
    %1189 = vadd.xlane.f32.xlu0 %v1188
    %v1190 = vpop.xlane.xlu0 %1189
    %v1191 = vld [vmem:[#allocation2] sm:$0x1]
    %v1193 = vlaneseq
    %v1194 = vshrl.u32 %v1193, 7
    %v1195 = vsub.s32 0, %v1194
    %v1196 = vrot.slane %v1191, %v1195
    %v1198 = vadd.f32 %v1190, %v1196
    %v1199 = vxor.u32 %v1198, 2147483648
    %v1200 = vmul.f32 %v1199, 1.442695
    %v1201 = vpow.pop %v1200
    %v1202 = vadd.f32 %v1201, 1.0
    %v1203 = vrcp.pop %v1202
    %v1204 = vmul.f32 1.0, %v1203
    %vm1205 = vcmask 7168
    %1206 = vst.msk [vmem:[#allocation11] sm:$0xff] %vm1205, %v1204
    // Predicated region
    $region74: #{tpu_custom_call.1} parent=1 // pred_check
      _
    $region75: #{tpu_custom_call.1} parent=1 // pred_check_branch
      %1208 = sbr.rel (0) target = $region77
    $region76: #{tpu_custom_call.1} parent=1 // pred_region
      // Predicated region
      $region78: #{tpu_custom_call.1} parent=76 // pred_check
        _
      $region79: #{tpu_custom_call.1} parent=76 // pred_check_branch
        %1210 = sbr.rel (0) target = $region81
      $region80: #{tpu_custom_call.1} parent=76 // pred_region
        // Predicated region
        $region82: #{tpu_custom_call.1} parent=80 // pred_check
          _
        $region83: #{tpu_custom_call.1} parent=80 // pred_check_branch
          %1212 = sbr.rel target = $region85
        $region84: #{tpu_custom_call.1} parent=80 // pred_region
          // Predicated region
          $region97: #{tpu_custom_call.1} parent=84 // pred_check
            _
          $region98: #{tpu_custom_call.1} parent=84 // pred_check_branch
            %1227 = sbr.rel (0) target = $region100
          $region99: #{tpu_custom_call.1} parent=84 // pred_region
            loop: start=0, step=1, limit=1
            $region101: #{tpu_custom_call.1} parent=99 // loop_pre_header
              _
            $region102: #{tpu_custom_call.1} parent=99 // loop_header
              %s1230 = sphi 0, %s1234
              %p1231 = scmp.ge.s32.totalorder %s1230, 1
              %s1235 = sphi [#allocation11], [#allocation11]
              %s1236 = sphi %s13, %s13
            $region103: #{tpu_custom_call.1} parent=99 // loop_header_branch
              %1233 = sbr.rel (%p1231) target = $region107
            $region104: #{tpu_custom_call.1} parent=99 // loop_body
              %v1237 = vld [vmem:[%s1235] sm:$0x3]
              %1238 = vst [vmem:[%s1236] sm:$0x3] %v1237
            $region105: #{tpu_custom_call.1} parent=99 // loop_footer
              %s1234 = sadd.s32 1, %s1230
            $region106: #{tpu_custom_call.1} parent=99 // loop_footer_branch
              %1229 = sbr.rel target = $region102
            $region107: #{tpu_custom_call.1} parent=99 // loop_exit
              _
          $region100: #{tpu_custom_call.1} parent=84 // pred_fallthru
            _
        $region85: #{tpu_custom_call.1} parent=80 // pred_fallthru
          _
        // Predicated region
        $region86: #{tpu_custom_call.1} parent=80 // pred_check
          _
        $region87: #{tpu_custom_call.1} parent=80 // pred_check_branch
          %1214 = sbr.rel (0) target = $region89
        $region88: #{tpu_custom_call.1} parent=80 // pred_region
          loop: start=0, step=1, limit=1
          $region90: #{tpu_custom_call.1} parent=88 // loop_pre_header
            _
          $region91: #{tpu_custom_call.1} parent=88 // loop_header
            %s1217 = sphi 0, %s1221
            %p1218 = scmp.ge.s32.totalorder %s1217, 1
            %s1222 = sphi [#allocation11], [#allocation11]
            %s1223 = sphi %s13, %s13
          $region92: #{tpu_custom_call.1} parent=88 // loop_header_branch
            %1220 = sbr.rel (%p1218) target = $region96
          $region93: #{tpu_custom_call.1} parent=88 // loop_body
            %v1224 = vld [vmem:[%s1222] sm:$0x3]
            %1225 = vst [vmem:[%s1223] sm:$0x3] %v1224
          $region94: #{tpu_custom_call.1} parent=88 // loop_footer
            %s1221 = sadd.s32 1, %s1217
          $region95: #{tpu_custom_call.1} parent=88 // loop_footer_branch
            %1216 = sbr.rel target = $region91
          $region96: #{tpu_custom_call.1} parent=88 // loop_exit
            _
        $region89: #{tpu_custom_call.1} parent=80 // pred_fallthru
          _
      $region81: #{tpu_custom_call.1} parent=76 // pred_fallthru
        _
      %1239 = vnop
    $region77: #{tpu_custom_call.1} parent=1 // pred_fallthru
      _
    // Predicated region
    $region108: #{tpu_custom_call.1} parent=1 // pred_check
      _
    $region109: #{tpu_custom_call.1} parent=1 // pred_check_branch
      %1241 = sbr.rel (0) target = $region111
    $region110: #{tpu_custom_call.1} parent=1 // pred_region
      _
    $region111: #{tpu_custom_call.1} parent=1 // pred_fallthru
      _
    %1242 = vsyncpa [#allocation4], 1
    %1243 = vsyncpa [#allocation6], 1
    %1244 = vsyncpa [#allocation9], 1

</llo_original>
